<compile_context>
chip_gen: v7x
topology: tpu7x:2x2x1
jax: 0.10.0
libtpu: 0.0.40
codegen_flags: <defaults>
</compile_context>

<pallas_src>
import functools

import jax
import jax.numpy as jnp
from jax import lax
from jax.experimental import pallas as pl
from jax.experimental.pallas import tpu as pltpu

EPS = 1e-5
GROUPS = 32
MXU_DTYPE = jnp.bfloat16   # operand dtype for MXU matmuls (accumulation stays f32)


def _group_scale_offset(xr, gamma, beta, amat_over_cnt):
    """GroupNorm of one sample's (HW, C) block expressed as per-channel scale/offset.

    amat_over_cnt: (C, C) same-group indicator already divided by (HW * group_size).
    The matmul both reduces the per-channel stats within a group and broadcasts the
    group statistic back per channel (stays on the MXU, no lane<->sublane reshapes).
    Stats are kept in f32. Single-pass E[x^2]-mean^2 (PyTorch-style biased variance);
    fine for normalized activations at these scales.
    Returns (a, b) with GN(x) = x * a + b, each shaped (1, C).
    """
    s = jnp.sum(xr, axis=0, keepdims=True)           # (1, C)
    ss = jnp.sum(xr * xr, axis=0, keepdims=True)     # (1, C)
    mean = jnp.dot(s, amat_over_cnt, preferred_element_type=jnp.float32)
    ex2 = jnp.dot(ss, amat_over_cnt, preferred_element_type=jnp.float32)
    var = ex2 - mean * mean
    inv = lax.rsqrt(var + EPS)
    a = inv * gamma
    b = beta - mean * a
    return a, b


def _group_amat(c, hw):
    g = c // GROUPS
    gi = lax.broadcasted_iota(jnp.int32, (c, c), 0) // g
    gj = lax.broadcasted_iota(jnp.int32, (c, c), 1) // g
    return (gi == gj).astype(jnp.float32) / float(hw * g)


def _pad_and_im2col(y, pad_ref, h, w, c):
    """Zero-pad y (HW, C) into VMEM scratch and build the (HW, 9C) im2col matrix."""
    pad_ref[...] = jnp.zeros_like(pad_ref)           # cheap; keeps 'parallel' grid safe
    pad_ref[1:h + 1, 1:w + 1, :] = y.reshape(h, w, c)
    xp = pad_ref[...]
    hw = h * w
    patches = [xp[dy:dy + h, dx:dx + w, :].reshape(hw, c)
               for dy in range(3) for dx in range(3)]
    return jnp.concatenate(patches, axis=-1)         # (HW, 9C)


# ---------------------------------------------------------------------------
# Kernel A: h2 = Conv3x3(SiLU(GroupNorm(x)))
# ---------------------------------------------------------------------------
def _in_layers_kernel(h, w, c, cout,
                      x_ref, g_ref, b_ref, amat_ref, wcol_ref, bias_ref,
                      o_ref, pad_ref):
    hw = h * w
    xr = x_ref[...].reshape(hw, c)                   # f32
    a, b = _group_scale_offset(xr, g_ref[...], b_ref[...], amat_ref[...])
    y = xr * a + b
    y = y * jax.nn.sigmoid(y)                        # SiLU (f32 elementwise)
    col = _pad_and_im2col(y, pad_ref, h, w, c)       # (HW, 9C)
    acc = jnp.dot(col.astype(MXU_DTYPE), wcol_ref[...],
                  preferred_element_type=jnp.float32) + bias_ref[...]
    o_ref[...] = acc.reshape(1, h, w, cout).astype(o_ref.dtype)


def in_layers(x, gamma, beta, w, b):
    n, h, ww, c = x.shape
    cout = w.shape[-1]
    assert c % GROUPS == 0
    amat = _group_amat(c, h * ww)
    wcol = w.reshape(9 * c, cout).astype(MXU_DTYPE)  # (dy, dx, ci) row-major = im2col order
    kern = functools.partial(_in_layers_kernel, h, ww, c, cout)
    return pl.pallas_call(
        kern,
        out_shape=jax.ShapeDtypeStruct((n, h, ww, cout), x.dtype),
        grid=(n,),
        in_specs=[pl.BlockSpec((1, h, ww, c), lambda i: (i, 0, 0, 0)),
                  pl.BlockSpec((1, c), lambda i: (0, 0)),
                  pl.BlockSpec((1, c), lambda i: (0, 0)),
                  pl.BlockSpec((c, c), lambda i: (0, 0)),
                  pl.BlockSpec((9 * c, cout), lambda i: (0, 0)),
                  pl.BlockSpec((1, cout), lambda i: (0, 0))],
        out_specs=pl.BlockSpec((1, h, ww, cout), lambda i: (i, 0, 0, 0)),
        scratch_shapes=[pltpu.VMEM((h + 2, ww + 2, c), jnp.float32)],
        compiler_params=pltpu.CompilerParams(
            dimension_semantics=("parallel",),
            vmem_limit_bytes=32 * 1024 * 1024),
    )(x, gamma.reshape(1, c), beta.reshape(1, c), amat, wcol, b.reshape(1, cout))


# ---------------------------------------------------------------------------
# Kernel B: out = skip(x) + Conv3x3(SiLU(GN(h2)*(1+scale)+shift)),
#           (scale, shift) = Linear(SiLU(emb)) computed in-kernel.
# ---------------------------------------------------------------------------
def _out_layers_kernel(h, w, c, cout, has_skip,
                       h_ref, e_ref, we_ref, be_ref, g_ref, b_ref, amat_ref,
                       wcol_ref, bias_ref, x_ref, *rest):
    if has_skip:
        ws_ref, bs_ref, o_ref, pad_ref = rest
    else:
        o_ref, pad_ref = rest
    hw = h * w

    # emb path: (1, E) -> SiLU -> Linear -> (1, 2*Cout) FiLM parameters
    ev = e_ref[0]                                    # (1, E) f32
    ae = ev * jax.nn.sigmoid(ev)
    eo = jnp.dot(ae.astype(MXU_DTYPE), we_ref[...],
                 preferred_element_type=jnp.float32) + be_ref[...]
    scale = eo[:, :cout]
    shift = eo[:, cout:]

    # GroupNorm(h2) * (1 + scale) + shift, then SiLU
    hr = h_ref[...].reshape(hw, cout)
    a, b = _group_scale_offset(hr, g_ref[...], b_ref[...], amat_ref[...])
    y = hr * a + b
    y = y * (1.0 + scale) + shift
    y = y * jax.nn.sigmoid(y)
    # TODO(synk): nn.Dropout(p=dropout) is an identity at the module default p=0.0.

    # 3x3 conv (zero-initialized by zero_module at init; kernel handles any weights)
    col = _pad_and_im2col(y, pad_ref, h, w, cout)
    acc = jnp.dot(col.astype(MXU_DTYPE), wcol_ref[...],
                  preferred_element_type=jnp.float32) + bias_ref[...]

    # skip connection + residual add (fused)
    xr = x_ref[...].reshape(hw, c)
    if has_skip:
        skip = jnp.dot(xr.astype(MXU_DTYPE), ws_ref[...],
                       preferred_element_type=jnp.float32) + bs_ref[...]
    else:
        skip = xr
    o_ref[...] = (skip + acc).reshape(1, h, w, cout).astype(o_ref.dtype)


def out_layers(hx, emb, x, gamma, beta, we, be, w2, b2, ws, bs):
    n, h, ww, cout = hx.shape
    c = x.shape[-1]
    e_dim = emb.shape[-1]
    assert cout % GROUPS == 0
    amat = _group_amat(cout, h * ww)
    wcol = w2.reshape(9 * cout, cout).astype(MXU_DTYPE)
    has_skip = ws is not None
    kern = functools.partial(_out_layers_kernel, h, ww, c, cout, has_skip)

    in_specs = [
        pl.BlockSpec((1, h, ww, cout), lambda i: (i, 0, 0, 0)),   # h2
        pl.BlockSpec((1, 1, e_dim), lambda i: (i, 0, 0)),         # emb
        pl.BlockSpec((e_dim, 2 * cout), lambda i: (0, 0)),        # we
        pl.BlockSpec((1, 2 * cout), lambda i: (0, 0)),            # be
        pl.BlockSpec((1, cout), lambda i: (0, 0)),                # gn2 gamma
        pl.BlockSpec((1, cout), lambda i: (0, 0)),                # gn2 beta
        pl.BlockSpec((cout, cout), lambda i: (0, 0)),             # group matrix
        pl.BlockSpec((9 * cout, cout), lambda i: (0, 0)),         # w2 (im2col layout)
        pl.BlockSpec((1, cout), lambda i: (0, 0)),                # b2
        pl.BlockSpec((1, h, ww, c), lambda i: (i, 0, 0, 0)),      # x (skip input)
    ]
    args = [hx, emb.reshape(n, 1, e_dim), we.astype(MXU_DTYPE),
            be.reshape(1, 2 * cout), gamma.reshape(1, cout), beta.reshape(1, cout),
            amat, wcol, b2.reshape(1, cout), x]
    if has_skip:
        in_specs += [pl.BlockSpec((c, cout), lambda i: (0, 0)),
                     pl.BlockSpec((1, cout), lambda i: (0, 0))]
        args += [ws.astype(MXU_DTYPE), bs.reshape(1, cout)]

    return pl.pallas_call(
        kern,
        out_shape=jax.ShapeDtypeStruct((n, h, ww, cout), hx.dtype),
        grid=(n,),
        in_specs=in_specs,
        out_specs=pl.BlockSpec((1, h, ww, cout), lambda i: (i, 0, 0, 0)),
        scratch_shapes=[pltpu.VMEM((h + 2, ww + 2, cout), jnp.float32)],
        compiler_params=pltpu.CompilerParams(
            dimension_semantics=("parallel",),
            vmem_limit_bytes=32 * 1024 * 1024),
    )(*args)


def resblock_forward(x, emb, p):
    # TODO(synk): GroupNorm needs full-spatial statistics; for large UNet resolutions
    # a spatial grid axis (two-pass GN with halo'd conv rows) would be added here.
    h2 = in_layers(x, p["gn1_g"], p["gn1_b"], p["w1"], p["b1"])
    out = out_layers(h2, emb, x, p["gn2_g"], p["gn2_b"], p["we"], p["be"],
                     p["w2"], p["b2"], p["ws"], p["bs"])
    return out, h2


def init_params(key, channels, emb_channels, out_channels):
    ks = jax.random.split(key, 6)
    p = {
        "gn1_g": jnp.ones((channels,), jnp.float32),
        "gn1_b": jnp.zeros((channels,), jnp.float32),
        "w1": 0.05 * jax.random.normal(ks[0], (3, 3, channels, out_channels), jnp.float32),
        "b1": 0.05 * jax.random.normal(ks[1], (out_channels,), jnp.float32),
        "we": 0.1 * jax.random.normal(ks[2], (emb_channels, 2 * out_channels), jnp.float32),
        "be": 0.1 * jax.random.normal(ks[3], (2 * out_channels,), jnp.float32),
        "gn2_g": jnp.ones((out_channels,), jnp.float32),
        "gn2_b": jnp.zeros((out_channels,), jnp.float32),
        # zero_module(Conv2d(...)) -> zero-initialized weights & bias
        "w2": jnp.zeros((3, 3, out_channels, out_channels), jnp.float32),
        "b2": jnp.zeros((out_channels,), jnp.float32),
    }
    if out_channels != channels:
        p["ws"] = 0.1 * jax.random.normal(ks[4], (channels, out_channels), jnp.float32)
        p["bs"] = 0.1 * jax.random.normal(ks[5], (out_channels,), jnp.float32)
    else:
        p["ws"] = None
        p["bs"] = None
    return p


def ref_forward(x, emb, p):
    """Pure-JAX reference matching the PyTorch module semantics (NHWC). Matmul
    operands are cast to bf16 (with f32 accumulation) to match the kernels' MXU
    precision; all other math is f32."""
    def gn(z, gamma, beta):
        n, h, w, c = z.shape
        g = c // GROUPS
        zr = z.reshape(n, h, w, GROUPS, g)
        mean = zr.mean(axis=(1, 2, 4), keepdims=True)
        var = jnp.mean((zr - mean) ** 2, axis=(1, 2, 4), keepdims=True)
        zn = ((zr - mean) / jnp.sqrt(var + EPS)).reshape(n, h, w, c)
        return zn * gamma + beta

    def conv(z, w, b):
        return lax.conv_general_dilated(
            z.astype(MXU_DTYPE), w.astype(MXU_DTYPE), (1, 1), "SAME",
            dimension_numbers=("NHWC", "HWIO", "NHWC"),
            preferred_element_type=jnp.float32) + b

    cout = p["w1"].shape[-1]
    h1 = jax.nn.silu(gn(x, p["gn1_g"], p["gn1_b"]))
    h2 = conv(h1, p["w1"], p["b1"])
    eo = jnp.dot(jax.nn.silu(emb).astype(MXU_DTYPE), p["we"].astype(MXU_DTYPE),
                 preferred_element_type=jnp.float32) + p["be"]
    scale, shift = eo[:, :cout], eo[:, cout:]
    h3 = (gn(h2, p["gn2_g"], p["gn2_b"]) * (1.0 + scale)[:, None, None, :]
          + shift[:, None, None, :])
    h3 = jax.nn.silu(h3)
    h4 = conv(h3, p["w2"], p["b2"])
    if p["ws"] is not None:
        skip = jnp.einsum("nhwc,cd->nhwd", x.astype(MXU_DTYPE),
                          p["ws"].astype(MXU_DTYPE),
                          preferred_element_type=jnp.float32) + p["bs"]
    else:
        skip = x
    return skip + h4, h2


if __name__ == "__main__":
    # Tolerance sized for bf16 MXU operands flowing through two chained convs;
    # genuine logic errors produce >1e-1 discrepancies.
    def check(name, got, want, tol=5e-3):
        err = float(jnp.max(jnp.abs(got - want)))
        assert err < tol, f"{name} max abs err {err}"

    key = jax.random.PRNGKey(0)

    # PyTorch forward would see x: (N, C, H, W) = (2, 32, 16, 16); we use NHWC.
    N, C, H, W, COUT, E = 2, 32, 16, 16, 64, 16      # out_channels != channels -> 1x1 skip
    kx, ke, kp, kw, kb = jax.random.split(key, 5)
    x = jax.random.normal(kx, (N, H, W, C), jnp.float32)
    emb = jax.random.normal(ke, (N, E), jnp.float32)
    params = init_params(kp, C, E, COUT)

    out, h2 = resblock_forward(x, emb, params)
    out = jax.block_until_ready(out)
    ref_out, ref_h2 = ref_forward(x, emb, params)
    check("h2", h2, ref_h2)
    check("out", out, ref_out)

    # Same config with non-zero second-conv weights so the out_layers conv path is
    # actually exercised (zero_module only zeroes the *initial* parameters).
    params2 = dict(params)
    params2["w2"] = 0.05 * jax.random.normal(kw, (3, 3, COUT, COUT), jnp.float32)
    params2["b2"] = 0.05 * jax.random.normal(kb, (COUT,), jnp.float32)
    out2, _ = resblock_forward(x, emb, params2)
    out2 = jax.block_until_ready(out2)
    ref_out2, _ = ref_forward(x, emb, params2)
    check("out_nonzero_w2", out2, ref_out2)

    # out_channels == channels -> identity skip path.
    params3 = init_params(jax.random.fold_in(key, 1), C, E, C)
    params3["w2"] = 0.05 * jax.random.normal(jax.random.fold_in(key, 2),
                                             (3, 3, C, C), jnp.float32)
    out3, _ = resblock_forward(x, emb, params3)
    out3 = jax.block_until_ready(out3)
    ref_out3, _ = ref_forward(x, emb, params3)
    check("out_identity_skip", out3, ref_out3)

    print("KERNEL_OK")
</pallas_src>

<mosaic_0001>
module attributes {stable_mosaic.version = 11 : i64} {
  func.func @_in_layers_kernel(%arg0: i32, %arg1: memref<1x16x16x32xf32, #tpu.memory_space<vmem>>, %arg2: memref<1x32xf32, #tpu.memory_space<vmem>>, %arg3: memref<1x32xf32, #tpu.memory_space<vmem>>, %arg4: memref<32x32xf32, #tpu.memory_space<vmem>>, %arg5: memref<288x64xbf16, #tpu.memory_space<vmem>>, %arg6: memref<1x64xf32, #tpu.memory_space<vmem>>, %arg7: memref<1x16x16x64xf32, #tpu.memory_space<vmem>>, %arg8: memref<18x18x32xf32, #tpu.memory_space<vmem>>) attributes {dimension_semantics = [#tpu.dimension_semantics<parallel>], iteration_bounds = array<i64: 2>, scalar_prefetch = 0 : i64, scratch_operands = 1 : i64, tpu.core_type = #tpu.core_type<tc>, window_params = [{transform_indices = @transform_0, window_bounds = array<i64: 1, 16, 16, 32>}, {pipeline_mode = #tpu.pipeline_mode<synchronous>, transform_indices = @transform_1, window_bounds = array<i64: 1, 32>}, {pipeline_mode = #tpu.pipeline_mode<synchronous>, transform_indices = @transform_2, window_bounds = array<i64: 1, 32>}, {pipeline_mode = #tpu.pipeline_mode<synchronous>, transform_indices = @transform_3, window_bounds = array<i64: 32, 32>}, {pipeline_mode = #tpu.pipeline_mode<synchronous>, transform_indices = @transform_4, window_bounds = array<i64: 288, 64>}, {pipeline_mode = #tpu.pipeline_mode<synchronous>, transform_indices = @transform_5, window_bounds = array<i64: 1, 64>}, {transform_indices = @transform_6, window_bounds = array<i64: 1, 16, 16, 64>}]} {
    %c0 = arith.constant 0 : index
    %c0_0 = arith.constant 0 : index
    %c0_1 = arith.constant 0 : index
    %c0_2 = arith.constant 0 : index
    %0 = vector.load %arg1[%c0, %c0_0, %c0_1, %c0_2] : memref<1x16x16x32xf32, #tpu.memory_space<vmem>>, vector<1x16x16x32xf32>
    %1 = vector.shape_cast %0 : vector<1x16x16x32xf32> to vector<256x32xf32>
    %c0_3 = arith.constant 0 : index
    %c0_4 = arith.constant 0 : index
    %2 = vector.load %arg2[%c0_3, %c0_4] : memref<1x32xf32, #tpu.memory_space<vmem>>, vector<1x32xf32>
    %c0_5 = arith.constant 0 : index
    %c0_6 = arith.constant 0 : index
    %3 = vector.load %arg3[%c0_5, %c0_6] : memref<1x32xf32, #tpu.memory_space<vmem>>, vector<1x32xf32>
    %c0_7 = arith.constant 0 : index
    %c0_8 = arith.constant 0 : index
    %4 = vector.load %arg4[%c0_7, %c0_8] : memref<32x32xf32, #tpu.memory_space<vmem>>, vector<32x32xf32>
    %cst = arith.constant dense<0.000000e+00> : vector<32xf32>
    %5 = vector.multi_reduction <add>, %1, %cst [0] : vector<256x32xf32> to vector<32xf32>
    %6 = vector.shape_cast %5 : vector<32xf32> to vector<1x32xf32>
    %7 = arith.mulf %1, %1 : vector<256x32xf32>
    %cst_9 = arith.constant dense<0.000000e+00> : vector<32xf32>
    %8 = vector.multi_reduction <add>, %7, %cst_9 [0] : vector<256x32xf32> to vector<32xf32>
    %9 = vector.shape_cast %8 : vector<32xf32> to vector<1x32xf32>
    %cst_10 = arith.constant dense<0.000000e+00> : vector<1x32xf32>
    %10 = tpu.matmul %6, %4, %cst_10 {dimension_numbers = #tpu.dot_dimension_numbers<[1], [0], [0], [1], [0, 0, 1, 1], [], []>} : vector<1x32xf32>, vector<32x32xf32>, vector<1x32xf32> -> vector<1x32xf32>
    %cst_11 = arith.constant dense<0.000000e+00> : vector<1x32xf32>
    %11 = tpu.matmul %9, %4, %cst_11 {dimension_numbers = #tpu.dot_dimension_numbers<[1], [0], [0], [1], [0, 0, 1, 1], [], []>} : vector<1x32xf32>, vector<32x32xf32>, vector<1x32xf32> -> vector<1x32xf32>
    %12 = arith.mulf %10, %10 : vector<1x32xf32>
    %13 = arith.subf %11, %12 : vector<1x32xf32>
    %cst_12 = arith.constant 9.99999974E-6 : f32
    %14 = vector.broadcast %cst_12 : f32 to vector<1x32xf32>
    %15 = arith.addf %13, %14 : vector<1x32xf32>
    %16 = math.rsqrt %15 : vector<1x32xf32>
    %17 = arith.mulf %16, %2 : vector<1x32xf32>
    %18 = arith.mulf %10, %17 : vector<1x32xf32>
    %19 = arith.subf %3, %18 : vector<1x32xf32>
    %20 = vector.broadcast %17 : vector<1x32xf32> to vector<256x32xf32>
    %21 = arith.mulf %1, %20 : vector<256x32xf32>
    %22 = vector.broadcast %19 : vector<1x32xf32> to vector<256x32xf32>
    %23 = arith.addf %21, %22 : vector<256x32xf32>
    %24 = arith.negf %23 : vector<256x32xf32>
    %25 = math.exp %24 : vector<256x32xf32>
    %cst_13 = arith.constant 1.000000e+00 : f32
    %26 = vector.broadcast %cst_13 : f32 to vector<256x32xf32>
    %27 = arith.addf %26, %25 : vector<256x32xf32>
    %28 = arith.divf %26, %27 : vector<256x32xf32>
    %29 = arith.mulf %23, %28 : vector<256x32xf32>
    %cst_14 = arith.constant 0.000000e+00 : f32
    %30 = vector.broadcast %cst_14 : f32 to vector<18x18x32xf32>
    %c0_15 = arith.constant 0 : index
    %c0_16 = arith.constant 0 : index
    %c0_17 = arith.constant 0 : index
    %31 = vector.load %arg8[%c0_15, %c0_16, %c0_17] : memref<18x18x32xf32, #tpu.memory_space<vmem>>, vector<18x18x32xf32>
    tpu.vector_store %arg8[%c0_15, %c0_16, %c0_17], %30 {strides = array<i32>} : memref<18x18x32xf32, #tpu.memory_space<vmem>>, vector<18x18x32xf32>,
    %32 = vector.shape_cast %29 : vector<256x32xf32> to vector<16x16x32xf32>
    %c1 = arith.constant 1 : index
    %c1_18 = arith.constant 1 : index
    %c0_19 = arith.constant 0 : index
    %33 = vector.load %arg8[%c1, %c1_18, %c0_19] : memref<18x18x32xf32, #tpu.memory_space<vmem>>, vector<16x16x32xf32>
    tpu.vector_store %arg8[%c1, %c1_18, %c0_19], %32 {strides = array<i32>} : memref<18x18x32xf32, #tpu.memory_space<vmem>>, vector<16x16x32xf32>,
    %c0_20 = arith.constant 0 : index
    %c0_21 = arith.constant 0 : index
    %c0_22 = arith.constant 0 : index
    %34 = vector.load %arg8[%c0_20, %c0_21, %c0_22] : memref<18x18x32xf32, #tpu.memory_space<vmem>>, vector<18x18x32xf32>
    %35 = vector.extract_strided_slice %34 {offsets = [0, 0, 0], sizes = [16, 16, 32], strides = [1, 1, 1]} : vector<18x18x32xf32> to vector<16x16x32xf32>
    %36 = vector.shape_cast %35 : vector<16x16x32xf32> to vector<256x32xf32>
    %37 = vector.extract_strided_slice %34 {offsets = [0, 1, 0], sizes = [16, 16, 32], strides = [1, 1, 1]} : vector<18x18x32xf32> to vector<16x16x32xf32>
    %38 = vector.shape_cast %37 : vector<16x16x32xf32> to vector<256x32xf32>
    %39 = vector.extract_strided_slice %34 {offsets = [0, 2, 0], sizes = [16, 16, 32], strides = [1, 1, 1]} : vector<18x18x32xf32> to vector<16x16x32xf32>
    %40 = vector.shape_cast %39 : vector<16x16x32xf32> to vector<256x32xf32>
    %41 = vector.extract_strided_slice %34 {offsets = [1, 0, 0], sizes = [16, 16, 32], strides = [1, 1, 1]} : vector<18x18x32xf32> to vector<16x16x32xf32>
    %42 = vector.shape_cast %41 : vector<16x16x32xf32> to vector<256x32xf32>
    %43 = vector.extract_strided_slice %34 {offsets = [1, 1, 0], sizes = [16, 16, 32], strides = [1, 1, 1]} : vector<18x18x32xf32> to vector<16x16x32xf32>
    %44 = vector.shape_cast %43 : vector<16x16x32xf32> to vector<256x32xf32>
    %45 = vector.extract_strided_slice %34 {offsets = [1, 2, 0], sizes = [16, 16, 32], strides = [1, 1, 1]} : vector<18x18x32xf32> to vector<16x16x32xf32>
    %46 = vector.shape_cast %45 : vector<16x16x32xf32> to vector<256x32xf32>
    %47 = vector.extract_strided_slice %34 {offsets = [2, 0, 0], sizes = [16, 16, 32], strides = [1, 1, 1]} : vector<18x18x32xf32> to vector<16x16x32xf32>
    %48 = vector.shape_cast %47 : vector<16x16x32xf32> to vector<256x32xf32>
    %49 = vector.extract_strided_slice %34 {offsets = [2, 1, 0], sizes = [16, 16, 32], strides = [1, 1, 1]} : vector<18x18x32xf32> to vector<16x16x32xf32>
    %50 = vector.shape_cast %49 : vector<16x16x32xf32> to vector<256x32xf32>
    %51 = vector.extract_strided_slice %34 {offsets = [2, 2, 0], sizes = [16, 16, 32], strides = [1, 1, 1]} : vector<18x18x32xf32> to vector<16x16x32xf32>
    %52 = vector.shape_cast %51 : vector<16x16x32xf32> to vector<256x32xf32>
    %53 = tpu.concatenate %36, %38, %40, %42, %44, %46, %48, %50, %52 in 1 : vector<256x32xf32>, vector<256x32xf32>, vector<256x32xf32>, vector<256x32xf32>, vector<256x32xf32>, vector<256x32xf32>, vector<256x32xf32>, vector<256x32xf32>, vector<256x32xf32> -> vector<256x288xf32>
    %54 = arith.truncf %53 : vector<256x288xf32> to vector<256x288xbf16>
    %c0_23 = arith.constant 0 : index
    %c0_24 = arith.constant 0 : index
    %55 = vector.load %arg5[%c0_23, %c0_24] : memref<288x64xbf16, #tpu.memory_space<vmem>>, vector<288x64xbf16>
    %cst_25 = arith.constant dense<0.000000e+00> : vector<256x64xf32>
    %56 = tpu.matmul %54, %55, %cst_25 {dimension_numbers = #tpu.dot_dimension_numbers<[1], [0], [0], [1], [0, 0, 1, 1], [], []>} : vector<256x288xbf16>, vector<288x64xbf16>, vector<256x64xf32> -> vector<256x64xf32>
    %c0_26 = arith.constant 0 : index
    %c0_27 = arith.constant 0 : index
    %57 = vector.load %arg6[%c0_26, %c0_27] : memref<1x64xf32, #tpu.memory_space<vmem>>, vector<1x64xf32>
    %58 = vector.broadcast %57 : vector<1x64xf32> to vector<256x64xf32>
    %59 = arith.addf %56, %58 : vector<256x64xf32>
    %60 = vector.shape_cast %59 : vector<256x64xf32> to vector<1x16x16x64xf32>
    %c0_28 = arith.constant 0 : index
    %c0_29 = arith.constant 0 : index
    %c0_30 = arith.constant 0 : index
    %c0_31 = arith.constant 0 : index
    %61 = vector.load %arg7[%c0_28, %c0_29, %c0_30, %c0_31] : memref<1x16x16x64xf32, #tpu.memory_space<vmem>>, vector<1x16x16x64xf32>
    tpu.vector_store %arg7[%c0_28, %c0_29, %c0_30, %c0_31], %60 {strides = array<i32>} : memref<1x16x16x64xf32, #tpu.memory_space<vmem>>, vector<1x16x16x64xf32>,
    return
  }
  func.func @transform_0(%arg0: i32) -> (i32, i32, i32, i32) {
    %c0_i32 = arith.constant 0 : i32
    %c0_i32_0 = arith.constant 0 : i32
    %c0_i32_1 = arith.constant 0 : i32
    %c0_i32_2 = arith.constant 0 : i32
    return %arg0, %c0_i32, %c0_i32_0, %c0_i32_1 : i32, i32, i32, i32
  }
  func.func @transform_1(%arg0: i32) -> (i32, i32) {
    %c0_i32 = arith.constant 0 : i32
    %c0_i32_0 = arith.constant 0 : i32
    %c0_i32_1 = arith.constant 0 : i32
    return %c0_i32, %c0_i32_0 : i32, i32
  }
  func.func @transform_2(%arg0: i32) -> (i32, i32) {
    %c0_i32 = arith.constant 0 : i32
    %c0_i32_0 = arith.constant 0 : i32
    %c0_i32_1 = arith.constant 0 : i32
    return %c0_i32, %c0_i32_0 : i32, i32
  }
  func.func @transform_3(%arg0: i32) -> (i32, i32) {
    %c0_i32 = arith.constant 0 : i32
    %c0_i32_0 = arith.constant 0 : i32
    %c0_i32_1 = arith.constant 0 : i32
    return %c0_i32, %c0_i32_0 : i32, i32
  }
  func.func @transform_4(%arg0: i32) -> (i32, i32) {
    %c0_i32 = arith.constant 0 : i32
    %c0_i32_0 = arith.constant 0 : i32
    %c0_i32_1 = arith.constant 0 : i32
    return %c0_i32, %c0_i32_0 : i32, i32
  }
  func.func @transform_5(%arg0: i32) -> (i32, i32) {
    %c0_i32 = arith.constant 0 : i32
    %c0_i32_0 = arith.constant 0 : i32
    %c0_i32_1 = arith.constant 0 : i32
    return %c0_i32, %c0_i32_0 : i32, i32
  }
  func.func @transform_6(%arg0: i32) -> (i32, i32, i32, i32) {
    %c0_i32 = arith.constant 0 : i32
    %c0_i32_0 = arith.constant 0 : i32
    %c0_i32_1 = arith.constant 0 : i32
    %c0_i32_2 = arith.constant 0 : i32
    return %arg0, %c0_i32, %c0_i32_0, %c0_i32_1 : i32, i32, i32, i32
  }
}

</mosaic_0001>

<llo_original>
// kernel: tpu_custom_call.1
$region0: #{tpu_custom_call.1}
  #allocation0 [shape = 'u32[]', space=smem, size = 0x4, offset = 0x4, fixed_abs, tag = 'smem constant byte address 0x4 - core index']
  #allocation1 [shape = 'u32[144,128]{1,0:T(1,128)}', space=vmem, size = 0x12000, scoped, tag = 'internal scratch']
  #allocation2 [shape = 'f32[18,18,32]{2,1,0:T(8,128)}', space=vmem, size = 0x36000, scoped, tag = 'scratch operand']
  %s0 = inlined_call_operand.hbm [shape: f32[2,16,16,32], index: 0, kind: input, shape index: {}]
  %s1 = inlined_call_operand.vmem [shape: f32[1,32], index: 1, kind: input, shape index: {}]
  %s2 = inlined_call_operand.vmem [shape: f32[1,32], index: 2, kind: input, shape index: {}]
  %s3 = inlined_call_operand.vmem [shape: f32[32,32], index: 3, kind: input, shape index: {}]
  %s4 = inlined_call_operand.vmem [shape: bf16[288,64], index: 4, kind: input, shape index: {}]
  %s5 = inlined_call_operand.vmem [shape: f32[1,64], index: 5, kind: input, shape index: {}]
  %s6 = inlined_call_operand.hbm [shape: f32[2,16,16,64], index: 6, kind: output, shape index: {}]
  %s7 = sld [smem:[#allocation0]]
  $region61: #{tpu_custom_call.1} parent=0
    _
  %s9 = ssub.s32 1, %s7
  %s10 = scalar_select 0, %s9, %s7
  $region1: #{tpu_custom_call.1} parent=0
    #allocation3 [shape = 'u8[262144]{0}', space=vmem, size = 0x40000, scoped, tag = 'input window, operand 0']
    #allocation4 [shape = 's32[2]{0}', space=sflag, size = 0x8, scoped, tag = 'scoped memory for tpu_custom_call.1']
    #allocation5 [shape = 's32[2]{0}', space=sflag, size = 0x8, scoped, tag = 'scoped memory for tpu_custom_call.1']
    #allocation6 [shape = 'u8[262144]{0}', space=vmem, size = 0x40000, scoped, tag = 'output window, operand 0']
    %11 = vsyncpa [#allocation4], 0
    %s12 = scalar_lea.sflag [#allocation4], 1
    %13 = vsyncpa %s12, 0
    %14 = vsyncpa [#allocation5], 0
    %s15 = scalar_lea.sflag [#allocation5], 1
    %16 = vsyncpa %s15, 0
    loop: start=0, step=1, limit=4
    $region2: #{tpu_custom_call.1} parent=1 // loop_pre_header
      _
    $region3: #{tpu_custom_call.1} parent=1 // loop_header
      %s18 = sphi 0, %s22
      %p19 = scmp.ge.s32.totalorder %s18, 4
      %s28 = sphi 0, %s30
      %s31 = sphi 0, %s28
      %s32 = sphi 0, %s31
      %s48 = sphi 0, %s32
      %s52 = sphi 0, %s52
      %s54 = sphi 0, %s52
      %s55 = sphi 0, %s54
      %s69 = sphi 0, %s55
      %s73 = sphi 0, %s73
      %s75 = sphi 0, %s73
      %s76 = sphi 0, %s75
      %s90 = sphi 0, %s76
      %s94 = sphi 0, %s94
      %s96 = sphi 0, %s94
      %s97 = sphi 0, %s96
      %s111 = sphi 0, %s97
      %s115 = sphi 0, %s115
      %s117 = sphi 0, %s115
      %s118 = sphi 0, %s117
      %s132 = sphi 0, %s118
      %s136 = sphi 0, %s136
      %s138 = sphi 0, %s136
      %s139 = sphi 0, %s138
      %s153 = sphi 0, %s139
      %s159 = sphi 0, %s161
      %s162 = sphi 0, %s159
      %s163 = sphi 0, %s162
      %s179 = sphi 0, %s163
    $region4: #{tpu_custom_call.1} parent=1 // loop_header_branch
      %21 = sbr.rel (%p19) target = $region8
    $region5: #{tpu_custom_call.1} parent=1 // loop_body
      %s23 = ssub.s32 %s18, 1
      %s24 = ssub.s32 %s18, 2
      %s25 = sadd.s32 %s18, 1
      %s26 = ssub.s32 %s18, %s25
      %p27 = scmp.eq.s32.totalorder %s26, 0
      %s29 = sadd.s32 %s28, 1
      %s30 = scalar_select %p27, %s28, %s29
      %p33 = pneg %p27
      %p34 = scmp.eq.s32.totalorder %s18, 1
      %p35 = por %p33, %p34
      %p36 = scmp.ne.s32.totalorder %s28, %s31
      %p37 = scmp.eq.s32.totalorder %s18, 0
      %p38 = por %p36, %p37
      %p39 = scmp.ne.s32.totalorder %s28, %s31
      %p40 = scmp.eq.s32.totalorder %s23, 1
      %p41 = por %p39, %p40
      %p42 = scmp.ne.s32.totalorder %s31, %s32
      %p43 = scmp.eq.s32.totalorder %s23, 0
      %p44 = por %p42, %p43
      %p45 = scmp.ne.s32.totalorder %s31, %s32
      %p46 = scmp.eq.s32.totalorder %s24, 1
      %p47 = por %p45, %p46
      %p49 = scmp.ne.s32.totalorder %s32, %s48
      %p50 = scmp.eq.s32.totalorder %s24, 0
      %p51 = por %p49, %p50
      %s53 = sadd.s32 %s52, 1
      %p56 = scmp.eq.s32.totalorder %s18, 1
      %p57 = scmp.ne.s32.totalorder %s52, %s54
      %p58 = scmp.eq.s32.totalorder %s18, 0
      %p59 = por %p57, %p58
      %p60 = scmp.ne.s32.totalorder %s52, %s54
      %p61 = scmp.eq.s32.totalorder %s23, 1
      %p62 = por %p60, %p61
      %p63 = scmp.ne.s32.totalorder %s54, %s55
      %p64 = scmp.eq.s32.totalorder %s23, 0
      %p65 = por %p63, %p64
      %p66 = scmp.ne.s32.totalorder %s54, %s55
      %p67 = scmp.eq.s32.totalorder %s24, 1
      %p68 = por %p66, %p67
      %p70 = scmp.ne.s32.totalorder %s55, %s69
      %p71 = scmp.eq.s32.totalorder %s24, 0
      %p72 = por %p70, %p71
      %s74 = sadd.s32 %s73, 1
      %p77 = scmp.eq.s32.totalorder %s18, 1
      %p78 = scmp.ne.s32.totalorder %s73, %s75
      %p79 = scmp.eq.s32.totalorder %s18, 0
      %p80 = por %p78, %p79
      %p81 = scmp.ne.s32.totalorder %s73, %s75
      %p82 = scmp.eq.s32.totalorder %s23, 1
      %p83 = por %p81, %p82
      %p84 = scmp.ne.s32.totalorder %s75, %s76
      %p85 = scmp.eq.s32.totalorder %s23, 0
      %p86 = por %p84, %p85
      %p87 = scmp.ne.s32.totalorder %s75, %s76
      %p88 = scmp.eq.s32.totalorder %s24, 1
      %p89 = por %p87, %p88
      %p91 = scmp.ne.s32.totalorder %s76, %s90
      %p92 = scmp.eq.s32.totalorder %s24, 0
      %p93 = por %p91, %p92
      %s95 = sadd.s32 %s94, 1
      %p98 = scmp.eq.s32.totalorder %s18, 1
      %p99 = scmp.ne.s32.totalorder %s94, %s96
      %p100 = scmp.eq.s32.totalorder %s18, 0
      %p101 = por %p99, %p100
      %p102 = scmp.ne.s32.totalorder %s94, %s96
      %p103 = scmp.eq.s32.totalorder %s23, 1
      %p104 = por %p102, %p103
      %p105 = scmp.ne.s32.totalorder %s96, %s97
      %p106 = scmp.eq.s32.totalorder %s23, 0
      %p107 = por %p105, %p106
      %p108 = scmp.ne.s32.totalorder %s96, %s97
      %p109 = scmp.eq.s32.totalorder %s24, 1
      %p110 = por %p108, %p109
      %p112 = scmp.ne.s32.totalorder %s97, %s111
      %p113 = scmp.eq.s32.totalorder %s24, 0
      %p114 = por %p112, %p113
      %s116 = sadd.s32 %s115, 1
      %p119 = scmp.eq.s32.totalorder %s18, 1
      %p120 = scmp.ne.s32.totalorder %s115, %s117
      %p121 = scmp.eq.s32.totalorder %s18, 0
      %p122 = por %p120, %p121
      %p123 = scmp.ne.s32.totalorder %s115, %s117
      %p124 = scmp.eq.s32.totalorder %s23, 1
      %p125 = por %p123, %p124
      %p126 = scmp.ne.s32.totalorder %s117, %s118
      %p127 = scmp.eq.s32.totalorder %s23, 0
      %p128 = por %p126, %p127
      %p129 = scmp.ne.s32.totalorder %s117, %s118
      %p130 = scmp.eq.s32.totalorder %s24, 1
      %p131 = por %p129, %p130
      %p133 = scmp.ne.s32.totalorder %s118, %s132
      %p134 = scmp.eq.s32.totalorder %s24, 0
      %p135 = por %p133, %p134
      %s137 = sadd.s32 %s136, 1
      %p140 = scmp.eq.s32.totalorder %s18, 1
      %p141 = scmp.ne.s32.totalorder %s136, %s138
      %p142 = scmp.eq.s32.totalorder %s18, 0
      %p143 = por %p141, %p142
      %p144 = scmp.ne.s32.totalorder %s136, %s138
      %p145 = scmp.eq.s32.totalorder %s23, 1
      %p146 = por %p144, %p145
      %p147 = scmp.ne.s32.totalorder %s138, %s139
      %p148 = scmp.eq.s32.totalorder %s23, 0
      %p149 = por %p147, %p148
      %p150 = scmp.ne.s32.totalorder %s138, %s139
      %p151 = scmp.eq.s32.totalorder %s24, 1
      %p152 = por %p150, %p151
      %p154 = scmp.ne.s32.totalorder %s139, %s153
      %p155 = scmp.eq.s32.totalorder %s24, 0
      %p156 = por %p154, %p155
      %s157 = ssub.s32 %s18, %s25
      %p158 = scmp.eq.s32.totalorder %s157, 0
      %s160 = sadd.s32 %s159, 1
      %s161 = scalar_select %p158, %s159, %s160
      %p164 = pneg %p158
      %p165 = scmp.eq.s32.totalorder %s18, 1
      %p166 = por %p164, %p165
      %p167 = scmp.ne.s32.totalorder %s159, %s162
      %p168 = scmp.eq.s32.totalorder %s18, 0
      %p169 = por %p167, %p168
      %p170 = scmp.ne.s32.totalorder %s159, %s162
      %p171 = scmp.eq.s32.totalorder %s23, 1
      %p172 = por %p170, %p171
      %p173 = scmp.ne.s32.totalorder %s162, %s163
      %p174 = scmp.eq.s32.totalorder %s23, 0
      %p175 = por %p173, %p174
      %p176 = scmp.ne.s32.totalorder %s162, %s163
      %p177 = scmp.eq.s32.totalorder %s24, 1
      %p178 = por %p176, %p177
      %p180 = scmp.ne.s32.totalorder %s163, %s179
      %p181 = scmp.eq.s32.totalorder %s24, 0
      %p182 = por %p180, %p181
      %p183 = scmp.le.s32.totalorder 1, %s18
      %p184 = scmp.lt.s32.totalorder %s18, 3
      %p185 = pnand %p183, %p184
      %p186 = pneg %p185
      // Predicated region
      $region9: #{tpu_custom_call.1} parent=5 // pred_check
        _
      $region10: #{tpu_custom_call.1} parent=5 // pred_check_branch
        %188 = sbr.rel (%p185) target = $region12
      $region11: #{tpu_custom_call.1} parent=5 // pred_region
        %s189 = ssub.s32 %s18, 1
        // Predicated region
        $region13: #{tpu_custom_call.1} parent=11 // pred_check
          %p190 = pneg %p65
        $region14: #{tpu_custom_call.1} parent=11 // pred_check_branch
          %192 = sbr.rel (%p190) target = $region16
        $region15: #{tpu_custom_call.1} parent=11 // pred_region
          _
        $region16: #{tpu_custom_call.1} parent=11 // pred_fallthru
          _
        // Predicated region
        $region17: #{tpu_custom_call.1} parent=11 // pred_check
          %p193 = pneg %p86
        $region18: #{tpu_custom_call.1} parent=11 // pred_check_branch
          %195 = sbr.rel (%p193) target = $region20
        $region19: #{tpu_custom_call.1} parent=11 // pred_region
          _
        $region20: #{tpu_custom_call.1} parent=11 // pred_fallthru
          _
        // Predicated region
        $region21: #{tpu_custom_call.1} parent=11 // pred_check
          %p196 = pneg %p107
        $region22: #{tpu_custom_call.1} parent=11 // pred_check_branch
          %198 = sbr.rel (%p196) target = $region24
        $region23: #{tpu_custom_call.1} parent=11 // pred_region
          _
        $region24: #{tpu_custom_call.1} parent=11 // pred_fallthru
          _
        // Predicated region
        $region25: #{tpu_custom_call.1} parent=11 // pred_check
          %p199 = pneg %p128
        $region26: #{tpu_custom_call.1} parent=11 // pred_check_branch
          %201 = sbr.rel (%p199) target = $region28
        $region27: #{tpu_custom_call.1} parent=11 // pred_region
          _
        $region28: #{tpu_custom_call.1} parent=11 // pred_fallthru
          _
        // Predicated region
        $region29: #{tpu_custom_call.1} parent=11 // pred_check
          %p202 = pneg %p149
        $region30: #{tpu_custom_call.1} parent=11 // pred_check_branch
          %204 = sbr.rel (%p202) target = $region32
        $region31: #{tpu_custom_call.1} parent=11 // pred_region
          _
        $region32: #{tpu_custom_call.1} parent=11 // pred_fallthru
          _
      $region12: #{tpu_custom_call.1} parent=5 // pred_fallthru
        _
      %p205 = scmp.lt.s32.totalorder %s18, 2
      // Predicated region
      $region33: #{tpu_custom_call.1} parent=5 // pred_check
        %p206 = pneg %p205
      $region34: #{tpu_custom_call.1} parent=5 // pred_check_branch
        %208 = sbr.rel (%p206) target = $region36
      $region35: #{tpu_custom_call.1} parent=5 // pred_region
        // Predicated region
        $region37: #{tpu_custom_call.1} parent=35 // pred_check
          %p209 = pneg %p38
        $region38: #{tpu_custom_call.1} parent=35 // pred_check_branch
          %211 = sbr.rel (%p209) target = $region40
        $region39: #{tpu_custom_call.1} parent=35 // pred_region
          %s212 = sand.u32 %s28, 1
          %s213 = scalar_lea.sflag [#allocation4], %s212
          %s214 = sand.u32 %s28, 1
          %s215 = smul.addr %s214, 256
          %s216 = scalar_lea.vmem [#allocation3], %s215
          %s218 = ssub.s32 4096, 4096
          %219 = vsyncadd %s213, %s218
          %s220 = smul.addr %s18, 32
          %s221 = smul.addr %s220, 128
          %s222 = scalar_lea.hbm %s0, %s221
          %s223 = sshll.u32 %s216, 4
          %s224 = int_to_ptr.vmem [resolvable:$true] %s223
          %229 = dma.hbm_to_vmem [thread:$0]  %s222, 4096, %s224, %s213, 128, 128, 8
        $region40: #{tpu_custom_call.1} parent=35 // pred_fallthru
          _
      $region36: #{tpu_custom_call.1} parent=5 // pred_fallthru
        _
      %p230 = scmp.le.s32.totalorder 1, %s18
      %p231 = scmp.lt.s32.totalorder %s18, 3
      %p232 = pnand %p230, %p231
      %p233 = pneg %p232
      // Predicated region
      $region41: #{tpu_custom_call.1} parent=5 // pred_check
        _
      $region42: #{tpu_custom_call.1} parent=5 // pred_check_branch
        %235 = sbr.rel (%p232) target = $region44
      $region43: #{tpu_custom_call.1} parent=5 // pred_region
        %s236 = ssub.s32 %s18, 1
        %s237 = sand.u32 %s31, 1
        %s238 = scalar_lea.sflag [#allocation4], %s237
        %s239 = sand.u32 %s31, 1
        %s240 = smul.addr %s239, 256
        %s241 = scalar_lea.vmem [#allocation3], %s240
        // Predicated region
        $region45: #{tpu_custom_call.1} parent=43 // pred_check
          %p242 = pneg %p44
        $region46: #{tpu_custom_call.1} parent=43 // pred_check_branch
          %244 = sbr.rel (%p242) target = $region48
        $region47: #{tpu_custom_call.1} parent=43 // pred_region
          %245 = dma.done %s238, 4096
        $region48: #{tpu_custom_call.1} parent=43 // pred_fallthru
          _
        %s246 = sand.u32 %s31, 1
        %s247 = scalar_lea.sflag [#allocation4], %s246
        %s248 = sand.u32 %s31, 1
        %s249 = smul.addr %s248, 256
        %s250 = scalar_lea.vmem [#allocation3], %s249
        %p251 = pneg %p44
        %p252 = pneg %p41
        %p253 = pneg %p65
        %p254 = pneg %p62
        %p255 = pneg %p86
        %p256 = pneg %p83
        %p257 = pneg %p107
        %p258 = pneg %p104
        %p259 = pneg %p128
        %p260 = pneg %p125
        %p261 = pneg %p149
        %p262 = pneg %p146
        %p263 = pneg %p175
        %p264 = pneg %p172
        %s265 = sand.u32 %s162, 1
        %s266 = scalar_lea.sflag [#allocation5], %s265
        %s267 = sand.u32 %s162, 1
        %s268 = smul.addr %s267, 256
        %s269 = scalar_lea.vmem [#allocation6], %s268
        %v271 = vld [vmem:[%s241] sm:$0xff]
        %v272 = vld [vmem:[%s241 + $0x8] sm:$0xff]
        %v273 = vld [vmem:[%s241 + $0x10] sm:$0xff]
        %v274 = vld [vmem:[%s241 + $0x18] sm:$0xff]
        %v275 = vld [vmem:[%s241 + $0x20] sm:$0xff]
        %v276 = vld [vmem:[%s241 + $0x28] sm:$0xff]
        %v277 = vld [vmem:[%s241 + $0x30] sm:$0xff]
        %v278 = vld [vmem:[%s241 + $0x38] sm:$0xff]
        %v279 = vld [vmem:[%s241 + $0x40] sm:$0xff]
        %v280 = vld [vmem:[%s241 + $0x48] sm:$0xff]
        %v281 = vld [vmem:[%s241 + $0x50] sm:$0xff]
        %v282 = vld [vmem:[%s241 + $0x58] sm:$0xff]
        %v283 = vld [vmem:[%s241 + $0x60] sm:$0xff]
        %v284 = vld [vmem:[%s241 + $0x68] sm:$0xff]
        %v285 = vld [vmem:[%s241 + $0x70] sm:$0xff]
        %v286 = vld [vmem:[%s241 + $0x78] sm:$0xff]
        %v287 = vld [vmem:[%s241 + $0x80] sm:$0xff]
        %v288 = vld [vmem:[%s241 + $0x88] sm:$0xff]
        %v289 = vld [vmem:[%s241 + $0x90] sm:$0xff]
        %v290 = vld [vmem:[%s241 + $0x98] sm:$0xff]
        %v291 = vld [vmem:[%s241 + $0xa0] sm:$0xff]
        %v292 = vld [vmem:[%s241 + $0xa8] sm:$0xff]
        %v293 = vld [vmem:[%s241 + $0xb0] sm:$0xff]
        %v294 = vld [vmem:[%s241 + $0xb8] sm:$0xff]
        %v295 = vld [vmem:[%s241 + $0xc0] sm:$0xff]
        %v296 = vld [vmem:[%s241 + $0xc8] sm:$0xff]
        %v297 = vld [vmem:[%s241 + $0xd0] sm:$0xff]
        %v298 = vld [vmem:[%s241 + $0xd8] sm:$0xff]
        %v299 = vld [vmem:[%s241 + $0xe0] sm:$0xff]
        %v300 = vld [vmem:[%s241 + $0xe8] sm:$0xff]
        %v301 = vld [vmem:[%s241 + $0xf0] sm:$0xff]
        %v302 = vld [vmem:[%s241 + $0xf8] sm:$0xff]
        %v303 = vld [vmem:[%s1] sm:$0x1]
        %v304 = vld [vmem:[%s2] sm:$0x1]
        %v305 = vld [vmem:[%s3] sm:$0xff]
        %v306 = vld [vmem:[%s3 + $0x8] sm:$0xff]
        %v307 = vld [vmem:[%s3 + $0x10] sm:$0xff]
        %v308 = vld [vmem:[%s3 + $0x18] sm:$0xff]
        %vm309 = vcmask 261120
        %v310 = vsel %vm309, %v271, 0.0
        %v311 = vsel %vm309, %v272, 0.0
        %v312 = vadd.f32 %v310, %v311
        %v313 = vsel %vm309, %v273, 0.0
        %v314 = vadd.f32 %v312, %v313
        %v315 = vsel %vm309, %v274, 0.0
        %v316 = vadd.f32 %v314, %v315
        %v317 = vsel %vm309, %v275, 0.0
        %v318 = vadd.f32 %v316, %v317
        %v319 = vsel %vm309, %v276, 0.0
        %v320 = vadd.f32 %v318, %v319
        %v321 = vsel %vm309, %v277, 0.0
        %v322 = vadd.f32 %v320, %v321
        %v323 = vsel %vm309, %v278, 0.0
        %v324 = vadd.f32 %v322, %v323
        %v325 = vsel %vm309, %v279, 0.0
        %v326 = vadd.f32 %v324, %v325
        %v327 = vsel %vm309, %v280, 0.0
        %v328 = vadd.f32 %v326, %v327
        %v329 = vsel %vm309, %v281, 0.0
        %v330 = vadd.f32 %v328, %v329
        %v331 = vsel %vm309, %v282, 0.0
        %v332 = vadd.f32 %v330, %v331
        %v333 = vsel %vm309, %v283, 0.0
        %v334 = vadd.f32 %v332, %v333
        %v335 = vsel %vm309, %v284, 0.0
        %v336 = vadd.f32 %v334, %v335
        %v337 = vsel %vm309, %v285, 0.0
        %v338 = vadd.f32 %v336, %v337
        %v339 = vsel %vm309, %v286, 0.0
        %v340 = vadd.f32 %v338, %v339
        %v341 = vsel %vm309, %v287, 0.0
        %v342 = vadd.f32 %v340, %v341
        %v343 = vsel %vm309, %v288, 0.0
        %v344 = vadd.f32 %v342, %v343
        %v345 = vsel %vm309, %v289, 0.0
        %v346 = vadd.f32 %v344, %v345
        %v347 = vsel %vm309, %v290, 0.0
        %v348 = vadd.f32 %v346, %v347
        %v349 = vsel %vm309, %v291, 0.0
        %v350 = vadd.f32 %v348, %v349
        %v351 = vsel %vm309, %v292, 0.0
        %v352 = vadd.f32 %v350, %v351
        %v353 = vsel %vm309, %v293, 0.0
        %v354 = vadd.f32 %v352, %v353
        %v355 = vsel %vm309, %v294, 0.0
        %v356 = vadd.f32 %v354, %v355
        %v357 = vsel %vm309, %v295, 0.0
        %v358 = vadd.f32 %v356, %v357
        %v359 = vsel %vm309, %v296, 0.0
        %v360 = vadd.f32 %v358, %v359
        %v361 = vsel %vm309, %v297, 0.0
        %v362 = vadd.f32 %v360, %v361
        %v363 = vsel %vm309, %v298, 0.0
        %v364 = vadd.f32 %v362, %v363
        %v365 = vsel %vm309, %v299, 0.0
        %v366 = vadd.f32 %v364, %v365
        %v367 = vsel %vm309, %v300, 0.0
        %v368 = vadd.f32 %v366, %v367
        %v369 = vsel %vm309, %v301, 0.0
        %v370 = vadd.f32 %v368, %v369
        %v371 = vsel %vm309, %v302, 0.0
        %v372 = vadd.f32 %v370, %v371
        %v373 = vrot.slane %v372, 4
        %v374 = vadd.f32 %v372, %v373
        %v375 = vrot.slane %v374, 2
        %v376 = vadd.f32 %v374, %v375
        %v377 = vrot.slane %v376, 1
        %v378 = vadd.f32 %v376, %v377
        %v379 = vmul.f32 %v271, %v271
        %v380 = vmul.f32 %v272, %v272
        %v381 = vmul.f32 %v273, %v273
        %v382 = vmul.f32 %v274, %v274
        %v383 = vmul.f32 %v275, %v275
        %v384 = vmul.f32 %v276, %v276
        %v385 = vmul.f32 %v277, %v277
        %v386 = vmul.f32 %v278, %v278
        %v387 = vmul.f32 %v279, %v279
        %v388 = vmul.f32 %v280, %v280
        %v389 = vmul.f32 %v281, %v281
        %v390 = vmul.f32 %v282, %v282
        %v391 = vmul.f32 %v283, %v283
        %v392 = vmul.f32 %v284, %v284
        %v393 = vmul.f32 %v285, %v285
        %v394 = vmul.f32 %v286, %v286
        %v395 = vmul.f32 %v287, %v287
        %v396 = vmul.f32 %v288, %v288
        %v397 = vmul.f32 %v289, %v289
        %v398 = vmul.f32 %v290, %v290
        %v399 = vmul.f32 %v291, %v291
        %v400 = vmul.f32 %v292, %v292
        %v401 = vmul.f32 %v293, %v293
        %v402 = vmul.f32 %v294, %v294
        %v403 = vmul.f32 %v295, %v295
        %v404 = vmul.f32 %v296, %v296
        %v405 = vmul.f32 %v297, %v297
        %v406 = vmul.f32 %v298, %v298
        %v407 = vmul.f32 %v299, %v299
        %v408 = vmul.f32 %v300, %v300
        %v409 = vmul.f32 %v301, %v301
        %v410 = vmul.f32 %v302, %v302
        %v411 = vsel %vm309, %v379, 0.0
        %v412 = vsel %vm309, %v380, 0.0
        %v413 = vadd.f32 %v411, %v412
        %v414 = vsel %vm309, %v381, 0.0
        %v415 = vadd.f32 %v413, %v414
        %v416 = vsel %vm309, %v382, 0.0
        %v417 = vadd.f32 %v415, %v416
        %v418 = vsel %vm309, %v383, 0.0
        %v419 = vadd.f32 %v417, %v418
        %v420 = vsel %vm309, %v384, 0.0
        %v421 = vadd.f32 %v419, %v420
        %v422 = vsel %vm309, %v385, 0.0
        %v423 = vadd.f32 %v421, %v422
        %v424 = vsel %vm309, %v386, 0.0
        %v425 = vadd.f32 %v423, %v424
        %v426 = vsel %vm309, %v387, 0.0
        %v427 = vadd.f32 %v425, %v426
        %v428 = vsel %vm309, %v388, 0.0
        %v429 = vadd.f32 %v427, %v428
        %v430 = vsel %vm309, %v389, 0.0
        %v431 = vadd.f32 %v429, %v430
        %v432 = vsel %vm309, %v390, 0.0
        %v433 = vadd.f32 %v431, %v432
        %v434 = vsel %vm309, %v391, 0.0
        %v435 = vadd.f32 %v433, %v434
        %v436 = vsel %vm309, %v392, 0.0
        %v437 = vadd.f32 %v435, %v436
        %v438 = vsel %vm309, %v393, 0.0
        %v439 = vadd.f32 %v437, %v438
        %v440 = vsel %vm309, %v394, 0.0
        %v441 = vadd.f32 %v439, %v440
        %v442 = vsel %vm309, %v395, 0.0
        %v443 = vadd.f32 %v441, %v442
        %v444 = vsel %vm309, %v396, 0.0
        %v445 = vadd.f32 %v443, %v444
        %v446 = vsel %vm309, %v397, 0.0
        %v447 = vadd.f32 %v445, %v446
        %v448 = vsel %vm309, %v398, 0.0
        %v449 = vadd.f32 %v447, %v448
        %v450 = vsel %vm309, %v399, 0.0
        %v451 = vadd.f32 %v449, %v450
        %v452 = vsel %vm309, %v400, 0.0
        %v453 = vadd.f32 %v451, %v452
        %v454 = vsel %vm309, %v401, 0.0
        %v455 = vadd.f32 %v453, %v454
        %v456 = vsel %vm309, %v402, 0.0
        %v457 = vadd.f32 %v455, %v456
        %v458 = vsel %vm309, %v403, 0.0
        %v459 = vadd.f32 %v457, %v458
        %v460 = vsel %vm309, %v404, 0.0
        %v461 = vadd.f32 %v459, %v460
        %v462 = vsel %vm309, %v405, 0.0
        %v463 = vadd.f32 %v461, %v462
        %v464 = vsel %vm309, %v406, 0.0
        %v465 = vadd.f32 %v463, %v464
        %v466 = vsel %vm309, %v407, 0.0
        %v467 = vadd.f32 %v465, %v466
        %v468 = vsel %vm309, %v408, 0.0
        %v469 = vadd.f32 %v467, %v468
        %v470 = vsel %vm309, %v409, 0.0
        %v471 = vadd.f32 %v469, %v470
        %v472 = vsel %vm309, %v410, 0.0
        %v473 = vadd.f32 %v471, %v472
        %v474 = vrot.slane %v473, 4
        %v475 = vadd.f32 %v473, %v474
        %v476 = vrot.slane %v475, 2
        %v477 = vadd.f32 %v475, %v476
        %v478 = vrot.slane %v477, 1
        %v479 = vadd.f32 %v477, %v478
        %v481 = vsel %vm309, %v378, 0
        %483 = vmatprep.subr.mxu0 0.0
        %484 = vmatpush1.msra.mxu0 %v305
        %485 = vmatprep.subr.mxu0 0.0
        %486 = vmatpush1.msra.mxu0 %v306
        %487 = vmatprep.subr.mxu0 0.0
        %488 = vmatpush1.msra.mxu0 %v307
        %489 = vmatprep.subr.mxu0 0.0
        %490 = vmatpush1.msra.mxu0 %v308
        %491 = vmatprep.subr.mxu0 0.0
        %492 = vmatpush1.msra.mxu0 0.0
        %493 = vmatprep.subr.mxu0 0.0
        %494 = vmatpush1.msra.mxu0 0.0
        %495 = vmatprep.subr.mxu0 0.0
        %496 = vmatpush1.msra.mxu0 0.0
        %497 = vmatprep.subr.mxu0 0.0
        %498 = vmatpush1.msra.mxu0 0.0
        %499 = vmatprep.subr.mxu0 0.0
        %500 = vmatpush1.msra.mxu0 0.0
        %501 = vmatprep.subr.mxu0 0.0
        %502 = vmatpush1.msra.mxu0 0.0
        %503 = vmatprep.subr.mxu0 0.0
        %504 = vmatpush1.msra.mxu0 0.0
        %505 = vmatprep.subr.mxu0 0.0
        %506 = vmatpush1.msra.mxu0 0.0
        %507 = vmatprep.subr.mxu0 0.0
        %508 = vmatpush1.msra.mxu0 0.0
        %509 = vmatprep.subr.mxu0 0.0
        %510 = vmatpush1.msra.mxu0 0.0
        %511 = vmatprep.subr.mxu0 0.0
        %512 = vmatpush1.msra.mxu0 0.0
        %513 = vmatprep.subr.mxu0 0.0
        %514 = vmatpush1.msra.mxu0 0.0
        %515 = vmatprep.subr.mxu0 0.0
        %516 = vmatpush1.msra.mxu0 0.0
        %517 = vmatprep.subr.mxu0 0.0
        %518 = vmatpush1.msra.mxu0 0.0
        %519 = vmatprep.subr.mxu0 0.0
        %520 = vmatpush1.msra.mxu0 0.0
        %521 = vmatprep.subr.mxu0 0.0
        %522 = vmatpush1.msra.mxu0 0.0
        %523 = vmatprep.subr.mxu0 0.0
        %524 = vmatpush1.msra.mxu0 0.0
        %525 = vmatprep.subr.mxu0 0.0
        %526 = vmatpush1.msra.mxu0 0.0
        %527 = vmatprep.subr.mxu0 0.0
        %528 = vmatpush1.msra.mxu0 0.0
        %529 = vmatprep.subr.mxu0 0.0
        %530 = vmatpush1.msra.mxu0 0.0
        %531 = vmatprep.subr.mxu0 0.0
        %532 = vmatpush1.msra.mxu0 0.0
        %533 = vmatprep.subr.mxu0 0.0
        %534 = vmatpush1.msra.mxu0 0.0
        %535 = vmatprep.subr.mxu0 0.0
        %536 = vmatpush1.msra.mxu0 0.0
        %537 = vmatprep.subr.mxu0 0.0
        %538 = vmatpush1.msra.mxu0 0.0
        %539 = vmatprep.subr.mxu0 0.0
        %540 = vmatpush1.msra.mxu0 0.0
        %541 = vmatprep.subr.mxu0 0.0
        %542 = vmatpush1.msra.mxu0 0.0
        %543 = vmatprep.subr.mxu0 0.0
        %544 = vmatpush1.msra.mxu0 0.0
        %545 = vmatprep.subr.mxu0 0.0
        %546 = vmatpush1.msra.mxu0 0.0
        %547 = vmatprep.mubr.f32.mxu0 0.0
        %548 = vmatmul.mubr.f32.gmra.mrb[0].mxu0 %v481
        %v549 = vpop.f32.mrb[0].mxu0
        %v550 = vadd.f32 0.0, %v549
        %v551 = vpop.f32.mrb[0].mxu0
        %552 = vdwg.mxu0
        %v554 = vsel %vm309, %v479, 0
        %556 = vmatprep.subr.mxu0 0.0
        %557 = vmatpush1.msra.mxu0 %v305
        %558 = vmatprep.subr.mxu0 0.0
        %559 = vmatpush1.msra.mxu0 %v306
        %560 = vmatprep.subr.mxu0 0.0
        %561 = vmatpush1.msra.mxu0 %v307
        %562 = vmatprep.subr.mxu0 0.0
        %563 = vmatpush1.msra.mxu0 %v308
        %564 = vmatprep.subr.mxu0 0.0
        %565 = vmatpush1.msra.mxu0 0.0
        %566 = vmatprep.subr.mxu0 0.0
        %567 = vmatpush1.msra.mxu0 0.0
        %568 = vmatprep.subr.mxu0 0.0
        %569 = vmatpush1.msra.mxu0 0.0
        %570 = vmatprep.subr.mxu0 0.0
        %571 = vmatpush1.msra.mxu0 0.0
        %572 = vmatprep.subr.mxu0 0.0
        %573 = vmatpush1.msra.mxu0 0.0
        %574 = vmatprep.subr.mxu0 0.0
        %575 = vmatpush1.msra.mxu0 0.0
        %576 = vmatprep.subr.mxu0 0.0
        %577 = vmatpush1.msra.mxu0 0.0
        %578 = vmatprep.subr.mxu0 0.0
        %579 = vmatpush1.msra.mxu0 0.0
        %580 = vmatprep.subr.mxu0 0.0
        %581 = vmatpush1.msra.mxu0 0.0
        %582 = vmatprep.subr.mxu0 0.0
        %583 = vmatpush1.msra.mxu0 0.0
        %584 = vmatprep.subr.mxu0 0.0
        %585 = vmatpush1.msra.mxu0 0.0
        %586 = vmatprep.subr.mxu0 0.0
        %587 = vmatpush1.msra.mxu0 0.0
        %588 = vmatprep.subr.mxu0 0.0
        %589 = vmatpush1.msra.mxu0 0.0
        %590 = vmatprep.subr.mxu0 0.0
        %591 = vmatpush1.msra.mxu0 0.0
        %592 = vmatprep.subr.mxu0 0.0
        %593 = vmatpush1.msra.mxu0 0.0
        %594 = vmatprep.subr.mxu0 0.0
        %595 = vmatpush1.msra.mxu0 0.0
        %596 = vmatprep.subr.mxu0 0.0
        %597 = vmatpush1.msra.mxu0 0.0
        %598 = vmatprep.subr.mxu0 0.0
        %599 = vmatpush1.msra.mxu0 0.0
        %600 = vmatprep.subr.mxu0 0.0
        %601 = vmatpush1.msra.mxu0 0.0
        %602 = vmatprep.subr.mxu0 0.0
        %603 = vmatpush1.msra.mxu0 0.0
        %604 = vmatprep.subr.mxu0 0.0
        %605 = vmatpush1.msra.mxu0 0.0
        %606 = vmatprep.subr.mxu0 0.0
        %607 = vmatpush1.msra.mxu0 0.0
        %608 = vmatprep.subr.mxu0 0.0
        %609 = vmatpush1.msra.mxu0 0.0
        %610 = vmatprep.subr.mxu0 0.0
        %611 = vmatpush1.msra.mxu0 0.0
        %612 = vmatprep.subr.mxu0 0.0
        %613 = vmatpush1.msra.mxu0 0.0
        %614 = vmatprep.subr.mxu0 0.0
        %615 = vmatpush1.msra.mxu0 0.0
        %616 = vmatprep.subr.mxu0 0.0
        %617 = vmatpush1.msra.mxu0 0.0
        %618 = vmatprep.subr.mxu0 0.0
        %619 = vmatpush1.msra.mxu0 0.0
        %620 = vmatprep.mubr.f32.mxu0 0.0
        %621 = vmatmul.mubr.f32.gmra.mrb[0].mxu0 %v554
        %v622 = vpop.f32.mrb[0].mxu0
        %v623 = vadd.f32 0.0, %v622
        %v624 = vpop.f32.mrb[0].mxu0
        %625 = vdwg.mxu0
        %v626 = vmul.f32 %v550, %v550
        %v627 = vsub.f32 %v623, %v626
        %v628 = vadd.f32 %v627, 1e-05
        %v629 = vrsqrt.pop %v628
        %v630 = vmul.f32 %v629, %v303
        %v631 = vmul.f32 %v550, %v630
        %v632 = vsub.f32 %v304, %v631
        %v633 = vlaneseq
        %v634 = vshrl.u32 %v633, 7
        %v635 = vsub.s32 0, %v634
        %v636 = vrot.slane %v630, %v635
        %v637 = vmul.f32 %v271, %v636
        %v638 = vmul.f32 %v272, %v636
        %v639 = vmul.f32 %v273, %v636
        %v640 = vmul.f32 %v274, %v636
        %v641 = vmul.f32 %v275, %v636
        %v642 = vmul.f32 %v276, %v636
        %v643 = vmul.f32 %v277, %v636
        %v644 = vmul.f32 %v278, %v636
        %v645 = vmul.f32 %v279, %v636
        %v646 = vmul.f32 %v280, %v636
        %v647 = vmul.f32 %v281, %v636
        %v648 = vmul.f32 %v282, %v636
        %v649 = vmul.f32 %v283, %v636
        %v650 = vmul.f32 %v284, %v636
        %v651 = vmul.f32 %v285, %v636
        %v652 = vmul.f32 %v286, %v636
        %v653 = vmul.f32 %v287, %v636
        %v654 = vmul.f32 %v288, %v636
        %v655 = vmul.f32 %v289, %v636
        %v656 = vmul.f32 %v290, %v636
        %v657 = vmul.f32 %v291, %v636
        %v658 = vmul.f32 %v292, %v636
        %v659 = vmul.f32 %v293, %v636
        %v660 = vmul.f32 %v294, %v636
        %v661 = vmul.f32 %v295, %v636
        %v662 = vmul.f32 %v296, %v636
        %v663 = vmul.f32 %v297, %v636
        %v664 = vmul.f32 %v298, %v636
        %v665 = vmul.f32 %v299, %v636
        %v666 = vmul.f32 %v300, %v636
        %v667 = vmul.f32 %v301, %v636
        %v668 = vmul.f32 %v302, %v636
        %v670 = vlaneseq
        %v671 = vshrl.u32 %v670, 7
        %v672 = vsub.s32 0, %v671
        %v673 = vrot.slane %v632, %v672
        %v675 = vadd.f32 %v637, %v673
        %v676 = vadd.f32 %v638, %v673
        %v677 = vadd.f32 %v639, %v673
        %v678 = vadd.f32 %v640, %v673
        %v679 = vadd.f32 %v641, %v673
        %v680 = vadd.f32 %v642, %v673
        %v681 = vadd.f32 %v643, %v673
        %v682 = vadd.f32 %v644, %v673
        %v683 = vadd.f32 %v645, %v673
        %v684 = vadd.f32 %v646, %v673
        %v685 = vadd.f32 %v647, %v673
        %v686 = vadd.f32 %v648, %v673
        %v687 = vadd.f32 %v649, %v673
        %v688 = vadd.f32 %v650, %v673
        %v689 = vadd.f32 %v651, %v673
        %v690 = vadd.f32 %v652, %v673
        %v691 = vadd.f32 %v653, %v673
        %v692 = vadd.f32 %v654, %v673
        %v693 = vadd.f32 %v655, %v673
        %v694 = vadd.f32 %v656, %v673
        %v695 = vadd.f32 %v657, %v673
        %v696 = vadd.f32 %v658, %v673
        %v697 = vadd.f32 %v659, %v673
        %v698 = vadd.f32 %v660, %v673
        %v699 = vadd.f32 %v661, %v673
        %v700 = vadd.f32 %v662, %v673
        %v701 = vadd.f32 %v663, %v673
        %v702 = vadd.f32 %v664, %v673
        %v703 = vadd.f32 %v665, %v673
        %v704 = vadd.f32 %v666, %v673
        %v705 = vadd.f32 %v667, %v673
        %v706 = vadd.f32 %v668, %v673
        %v707 = vxor.u32 %v675, 2147483648
        %v708 = vxor.u32 %v676, 2147483648
        %v709 = vxor.u32 %v677, 2147483648
        %v710 = vxor.u32 %v678, 2147483648
        %v711 = vxor.u32 %v679, 2147483648
        %v712 = vxor.u32 %v680, 2147483648
        %v713 = vxor.u32 %v681, 2147483648
        %v714 = vxor.u32 %v682, 2147483648
        %v715 = vxor.u32 %v683, 2147483648
        %v716 = vxor.u32 %v684, 2147483648
        %v717 = vxor.u32 %v685, 2147483648
        %v718 = vxor.u32 %v686, 2147483648
        %v719 = vxor.u32 %v687, 2147483648
        %v720 = vxor.u32 %v688, 2147483648
        %v721 = vxor.u32 %v689, 2147483648
        %v722 = vxor.u32 %v690, 2147483648
        %v723 = vxor.u32 %v691, 2147483648
        %v724 = vxor.u32 %v692, 2147483648
        %v725 = vxor.u32 %v693, 2147483648
        %v726 = vxor.u32 %v694, 2147483648
        %v727 = vxor.u32 %v695, 2147483648
        %v728 = vxor.u32 %v696, 2147483648
        %v729 = vxor.u32 %v697, 2147483648
        %v730 = vxor.u32 %v698, 2147483648
        %v731 = vxor.u32 %v699, 2147483648
        %v732 = vxor.u32 %v700, 2147483648
        %v733 = vxor.u32 %v701, 2147483648
        %v734 = vxor.u32 %v702, 2147483648
        %v735 = vxor.u32 %v703, 2147483648
        %v736 = vxor.u32 %v704, 2147483648
        %v737 = vxor.u32 %v705, 2147483648
        %v738 = vxor.u32 %v706, 2147483648
        %v739 = vmul.f32 %v707, 1.442695
        %v740 = vpow.pop %v739
        %v741 = vmul.f32 %v708, 1.442695
        %v742 = vpow.pop %v741
        %v743 = vmul.f32 %v709, 1.442695
        %v744 = vpow.pop %v743
        %v745 = vmul.f32 %v710, 1.442695
        %v746 = vpow.pop %v745
        %v747 = vmul.f32 %v711, 1.442695
        %v748 = vpow.pop %v747
        %v749 = vmul.f32 %v712, 1.442695
        %v750 = vpow.pop %v749
        %v751 = vmul.f32 %v713, 1.442695
        %v752 = vpow.pop %v751
        %v753 = vmul.f32 %v714, 1.442695
        %v754 = vpow.pop %v753
        %v755 = vmul.f32 %v715, 1.442695
        %v756 = vpow.pop %v755
        %v757 = vmul.f32 %v716, 1.442695
        %v758 = vpow.pop %v757
        %v759 = vmul.f32 %v717, 1.442695
        %v760 = vpow.pop %v759
        %v761 = vmul.f32 %v718, 1.442695
        %v762 = vpow.pop %v761
        %v763 = vmul.f32 %v719, 1.442695
        %v764 = vpow.pop %v763
        %v765 = vmul.f32 %v720, 1.442695
        %v766 = vpow.pop %v765
        %v767 = vmul.f32 %v721, 1.442695
        %v768 = vpow.pop %v767
        %v769 = vmul.f32 %v722, 1.442695
        %v770 = vpow.pop %v769
        %v771 = vmul.f32 %v723, 1.442695
        %v772 = vpow.pop %v771
        %v773 = vmul.f32 %v724, 1.442695
        %v774 = vpow.pop %v773
        %v775 = vmul.f32 %v725, 1.442695
        %v776 = vpow.pop %v775
        %v777 = vmul.f32 %v726, 1.442695
        %v778 = vpow.pop %v777
        %v779 = vmul.f32 %v727, 1.442695
        %v780 = vpow.pop %v779
        %v781 = vmul.f32 %v728, 1.442695
        %v782 = vpow.pop %v781
        %v783 = vmul.f32 %v729, 1.442695
        %v784 = vpow.pop %v783
        %v785 = vmul.f32 %v730, 1.442695
        %v786 = vpow.pop %v785
        %v787 = vmul.f32 %v731, 1.442695
        %v788 = vpow.pop %v787
        %v789 = vmul.f32 %v732, 1.442695
        %v790 = vpow.pop %v789
        %v791 = vmul.f32 %v733, 1.442695
        %v792 = vpow.pop %v791
        %v793 = vmul.f32 %v734, 1.442695
        %v794 = vpow.pop %v793
        %v795 = vmul.f32 %v735, 1.442695
        %v796 = vpow.pop %v795
        %v797 = vmul.f32 %v736, 1.442695
        %v798 = vpow.pop %v797
        %v799 = vmul.f32 %v737, 1.442695
        %v800 = vpow.pop %v799
        %v801 = vmul.f32 %v738, 1.442695
        %v802 = vpow.pop %v801
        %v803 = vadd.f32 %v740, 1.0
        %v804 = vadd.f32 %v742, 1.0
        %v805 = vadd.f32 %v744, 1.0
        %v806 = vadd.f32 %v746, 1.0
        %v807 = vadd.f32 %v748, 1.0
        %v808 = vadd.f32 %v750, 1.0
        %v809 = vadd.f32 %v752, 1.0
        %v810 = vadd.f32 %v754, 1.0
        %v811 = vadd.f32 %v756, 1.0
        %v812 = vadd.f32 %v758, 1.0
        %v813 = vadd.f32 %v760, 1.0
        %v814 = vadd.f32 %v762, 1.0
        %v815 = vadd.f32 %v764, 1.0
        %v816 = vadd.f32 %v766, 1.0
        %v817 = vadd.f32 %v768, 1.0
        %v818 = vadd.f32 %v770, 1.0
        %v819 = vadd.f32 %v772, 1.0
        %v820 = vadd.f32 %v774, 1.0
        %v821 = vadd.f32 %v776, 1.0
        %v822 = vadd.f32 %v778, 1.0
        %v823 = vadd.f32 %v780, 1.0
        %v824 = vadd.f32 %v782, 1.0
        %v825 = vadd.f32 %v784, 1.0
        %v826 = vadd.f32 %v786, 1.0
        %v827 = vadd.f32 %v788, 1.0
        %v828 = vadd.f32 %v790, 1.0
        %v829 = vadd.f32 %v792, 1.0
        %v830 = vadd.f32 %v794, 1.0
        %v831 = vadd.f32 %v796, 1.0
        %v832 = vadd.f32 %v798, 1.0
        %v833 = vadd.f32 %v800, 1.0
        %v834 = vadd.f32 %v802, 1.0
        %v835 = vrcp.pop %v803
        %v836 = vmul.f32 1.0, %v835
        %v837 = vrcp.pop %v804
        %v838 = vmul.f32 1.0, %v837
        %v839 = vrcp.pop %v805
        %v840 = vmul.f32 1.0, %v839
        %v841 = vrcp.pop %v806
        %v842 = vmul.f32 1.0, %v841
        %v843 = vrcp.pop %v807
        %v844 = vmul.f32 1.0, %v843
        %v845 = vrcp.pop %v808
        %v846 = vmul.f32 1.0, %v845
        %v847 = vrcp.pop %v809
        %v848 = vmul.f32 1.0, %v847
        %v849 = vrcp.pop %v810
        %v850 = vmul.f32 1.0, %v849
        %v851 = vrcp.pop %v811
        %v852 = vmul.f32 1.0, %v851
        %v853 = vrcp.pop %v812
        %v854 = vmul.f32 1.0, %v853
        %v855 = vrcp.pop %v813
        %v856 = vmul.f32 1.0, %v855
        %v857 = vrcp.pop %v814
        %v858 = vmul.f32 1.0, %v857
        %v859 = vrcp.pop %v815
        %v860 = vmul.f32 1.0, %v859
        %v861 = vrcp.pop %v816
        %v862 = vmul.f32 1.0, %v861
        %v863 = vrcp.pop %v817
        %v864 = vmul.f32 1.0, %v863
        %v865 = vrcp.pop %v818
        %v866 = vmul.f32 1.0, %v865
        %v867 = vrcp.pop %v819
        %v868 = vmul.f32 1.0, %v867
        %v869 = vrcp.pop %v820
        %v870 = vmul.f32 1.0, %v869
        %v871 = vrcp.pop %v821
        %v872 = vmul.f32 1.0, %v871
        %v873 = vrcp.pop %v822
        %v874 = vmul.f32 1.0, %v873
        %v875 = vrcp.pop %v823
        %v876 = vmul.f32 1.0, %v875
        %v877 = vrcp.pop %v824
        %v878 = vmul.f32 1.0, %v877
        %v879 = vrcp.pop %v825
        %v880 = vmul.f32 1.0, %v879
        %v881 = vrcp.pop %v826
        %v882 = vmul.f32 1.0, %v881
        %v883 = vrcp.pop %v827
        %v884 = vmul.f32 1.0, %v883
        %v885 = vrcp.pop %v828
        %v886 = vmul.f32 1.0, %v885
        %v887 = vrcp.pop %v829
        %v888 = vmul.f32 1.0, %v887
        %v889 = vrcp.pop %v830
        %v890 = vmul.f32 1.0, %v889
        %v891 = vrcp.pop %v831
        %v892 = vmul.f32 1.0, %v891
        %v893 = vrcp.pop %v832
        %v894 = vmul.f32 1.0, %v893
        %v895 = vrcp.pop %v833
        %v896 = vmul.f32 1.0, %v895
        %v897 = vrcp.pop %v834
        %v898 = vmul.f32 1.0, %v897
        %v899 = vmul.f32 %v675, %v836
        %v900 = vmul.f32 %v676, %v838
        %v901 = vmul.f32 %v677, %v840
        %v902 = vmul.f32 %v678, %v842
        %v903 = vmul.f32 %v679, %v844
        %v904 = vmul.f32 %v680, %v846
        %v905 = vmul.f32 %v681, %v848
        %v906 = vmul.f32 %v682, %v850
        %v907 = vmul.f32 %v683, %v852
        %v908 = vmul.f32 %v684, %v854
        %v909 = vmul.f32 %v685, %v856
        %v910 = vmul.f32 %v686, %v858
        %v911 = vmul.f32 %v687, %v860
        %v912 = vmul.f32 %v688, %v862
        %v913 = vmul.f32 %v689, %v864
        %v914 = vmul.f32 %v690, %v866
        %v915 = vmul.f32 %v691, %v868
        %v916 = vmul.f32 %v692, %v870
        %v917 = vmul.f32 %v693, %v872
        %v918 = vmul.f32 %v694, %v874
        %v919 = vmul.f32 %v695, %v876
        %v920 = vmul.f32 %v696, %v878
        %v921 = vmul.f32 %v697, %v880
        %v922 = vmul.f32 %v698, %v882
        %v923 = vmul.f32 %v699, %v884
        %v924 = vmul.f32 %v700, %v886
        %v925 = vmul.f32 %v701, %v888
        %v926 = vmul.f32 %v702, %v890
        %v927 = vmul.f32 %v703, %v892
        %v928 = vmul.f32 %v704, %v894
        %v929 = vmul.f32 %v705, %v896
        %v930 = vmul.f32 %v706, %v898
        %931 = vst.msk [vmem:[#allocation2] sm:$0xff] %vm309, 0.0
        %932 = vst.msk [vmem:[#allocation2 + $0x8] sm:$0xff] %vm309, 0.0
        %vm933 = vcmask 254976
        %934 = vst.msk [vmem:[#allocation2 + $0x10] sm:$0x3] %vm933, 0.0
        %935 = vst.msk [vmem:[#allocation2 + $0x18] sm:$0xff] %vm309, 0.0
        %936 = vst.msk [vmem:[#allocation2 + $0x20] sm:$0xff] %vm309, 0.0
        %937 = vst.msk [vmem:[#allocation2 + $0x28] sm:$0x3] %vm933, 0.0
        %938 = vst.msk [vmem:[#allocation2 + $0x30] sm:$0xff] %vm309, 0.0
        %939 = vst.msk [vmem:[#allocation2 + $0x38] sm:$0xff] %vm309, 0.0
        %940 = vst.msk [vmem:[#allocation2 + $0x40] sm:$0x3] %vm933, 0.0
        %941 = vst.msk [vmem:[#allocation2 + $0x48] sm:$0xff] %vm309, 0.0
        %942 = vst.msk [vmem:[#allocation2 + $0x50] sm:$0xff] %vm309, 0.0
        %943 = vst.msk [vmem:[#allocation2 + $0x58] sm:$0x3] %vm933, 0.0
        %944 = vst.msk [vmem:[#allocation2 + $0x60] sm:$0xff] %vm309, 0.0
        %945 = vst.msk [vmem:[#allocation2 + $0x68] sm:$0xff] %vm309, 0.0
        %946 = vst.msk [vmem:[#allocation2 + $0x70] sm:$0x3] %vm933, 0.0
        %947 = vst.msk [vmem:[#allocation2 + $0x78] sm:$0xff] %vm309, 0.0
        %948 = vst.msk [vmem:[#allocation2 + $0x80] sm:$0xff] %vm309, 0.0
        %949 = vst.msk [vmem:[#allocation2 + $0x88] sm:$0x3] %vm933, 0.0
        %950 = vst.msk [vmem:[#allocation2 + $0x90] sm:$0xff] %vm309, 0.0
        %951 = vst.msk [vmem:[#allocation2 + $0x98] sm:$0xff] %vm309, 0.0
        %952 = vst.msk [vmem:[#allocation2 + $0xa0] sm:$0x3] %vm933, 0.0
        %953 = vst.msk [vmem:[#allocation2 + $0xa8] sm:$0xff] %vm309, 0.0
        %954 = vst.msk [vmem:[#allocation2 + $0xb0] sm:$0xff] %vm309, 0.0
        %955 = vst.msk [vmem:[#allocation2 + $0xb8] sm:$0x3] %vm933, 0.0
        %956 = vst.msk [vmem:[#allocation2 + $0xc0] sm:$0xff] %vm309, 0.0
        %957 = vst.msk [vmem:[#allocation2 + $0xc8] sm:$0xff] %vm309, 0.0
        %958 = vst.msk [vmem:[#allocation2 + $0xd0] sm:$0x3] %vm933, 0.0
        %959 = vst.msk [vmem:[#allocation2 + $0xd8] sm:$0xff] %vm309, 0.0
        %960 = vst.msk [vmem:[#allocation2 + $0xe0] sm:$0xff] %vm309, 0.0
        %961 = vst.msk [vmem:[#allocation2 + $0xe8] sm:$0x3] %vm933, 0.0
        %962 = vst.msk [vmem:[#allocation2 + $0xf0] sm:$0xff] %vm309, 0.0
        %963 = vst.msk [vmem:[#allocation2 + $0xf8] sm:$0xff] %vm309, 0.0
        %964 = vst.msk [vmem:[#allocation2 + $0x100] sm:$0x3] %vm933, 0.0
        %965 = vst.msk [vmem:[#allocation2 + $0x108] sm:$0xff] %vm309, 0.0
        %966 = vst.msk [vmem:[#allocation2 + $0x110] sm:$0xff] %vm309, 0.0
        %967 = vst.msk [vmem:[#allocation2 + $0x118] sm:$0x3] %vm933, 0.0
        %968 = vst.msk [vmem:[#allocation2 + $0x120] sm:$0xff] %vm309, 0.0
        %969 = vst.msk [vmem:[#allocation2 + $0x128] sm:$0xff] %vm309, 0.0
        %970 = vst.msk [vmem:[#allocation2 + $0x130] sm:$0x3] %vm933, 0.0
        %971 = vst.msk [vmem:[#allocation2 + $0x138] sm:$0xff] %vm309, 0.0
        %972 = vst.msk [vmem:[#allocation2 + $0x140] sm:$0xff] %vm309, 0.0
        %973 = vst.msk [vmem:[#allocation2 + $0x148] sm:$0x3] %vm933, 0.0
        %974 = vst.msk [vmem:[#allocation2 + $0x150] sm:$0xff] %vm309, 0.0
        %975 = vst.msk [vmem:[#allocation2 + $0x158] sm:$0xff] %vm309, 0.0
        %976 = vst.msk [vmem:[#allocation2 + $0x160] sm:$0x3] %vm933, 0.0
        %977 = vst.msk [vmem:[#allocation2 + $0x168] sm:$0xff] %vm309, 0.0
        %978 = vst.msk [vmem:[#allocation2 + $0x170] sm:$0xff] %vm309, 0.0
        %979 = vst.msk [vmem:[#allocation2 + $0x178] sm:$0x3] %vm933, 0.0
        %980 = vst.msk [vmem:[#allocation2 + $0x180] sm:$0xff] %vm309, 0.0
        %981 = vst.msk [vmem:[#allocation2 + $0x188] sm:$0xff] %vm309, 0.0
        %982 = vst.msk [vmem:[#allocation2 + $0x190] sm:$0x3] %vm933, 0.0
        %983 = vst.msk [vmem:[#allocation2 + $0x198] sm:$0xff] %vm309, 0.0
        %984 = vst.msk [vmem:[#allocation2 + $0x1a0] sm:$0xff] %vm309, 0.0
        %985 = vst.msk [vmem:[#allocation2 + $0x1a8] sm:$0x3] %vm933, 0.0
        %s986 = scalar_lea.vmem [#allocation2], 24
        %987 = vst.msk [vmem:[%s986 + $0x1] sm:$0xff] %vm309, %v899
        %988 = vst.msk [vmem:[%s986 + $0x9] sm:$0xff] %vm309, %v900
        %989 = vst.msk [vmem:[%s986 + $0x19] sm:$0xff] %vm309, %v901
        %990 = vst.msk [vmem:[%s986 + $0x21] sm:$0xff] %vm309, %v902
        %991 = vst.msk [vmem:[%s986 + $0x31] sm:$0xff] %vm309, %v903
        %992 = vst.msk [vmem:[%s986 + $0x39] sm:$0xff] %vm309, %v904
        %993 = vst.msk [vmem:[%s986 + $0x49] sm:$0xff] %vm309, %v905
        %994 = vst.msk [vmem:[%s986 + $0x51] sm:$0xff] %vm309, %v906
        %995 = vst.msk [vmem:[%s986 + $0x61] sm:$0xff] %vm309, %v907
        %996 = vst.msk [vmem:[%s986 + $0x69] sm:$0xff] %vm309, %v908
        %997 = vst.msk [vmem:[%s986 + $0x79] sm:$0xff] %vm309, %v909
        %998 = vst.msk [vmem:[%s986 + $0x81] sm:$0xff] %vm309, %v910
        %999 = vst.msk [vmem:[%s986 + $0x91] sm:$0xff] %vm309, %v911
        %1000 = vst.msk [vmem:[%s986 + $0x99] sm:$0xff] %vm309, %v912
        %1001 = vst.msk [vmem:[%s986 + $0xa9] sm:$0xff] %vm309, %v913
        %1002 = vst.msk [vmem:[%s986 + $0xb1] sm:$0xff] %vm309, %v914
        %1003 = vst.msk [vmem:[%s986 + $0xc1] sm:$0xff] %vm309, %v915
        %1004 = vst.msk [vmem:[%s986 + $0xc9] sm:$0xff] %vm309, %v916
        %1005 = vst.msk [vmem:[%s986 + $0xd9] sm:$0xff] %vm309, %v917
        %1006 = vst.msk [vmem:[%s986 + $0xe1] sm:$0xff] %vm309, %v918
        %1007 = vst.msk [vmem:[%s986 + $0xf1] sm:$0xff] %vm309, %v919
        %1008 = vst.msk [vmem:[%s986 + $0xf9] sm:$0xff] %vm309, %v920
        %1009 = vst.msk [vmem:[%s986 + $0x109] sm:$0xff] %vm309, %v921
        %1010 = vst.msk [vmem:[%s986 + $0x111] sm:$0xff] %vm309, %v922
        %1011 = vst.msk [vmem:[%s986 + $0x121] sm:$0xff] %vm309, %v923
        %1012 = vst.msk [vmem:[%s986 + $0x129] sm:$0xff] %vm309, %v924
        %1013 = vst.msk [vmem:[%s986 + $0x139] sm:$0xff] %vm309, %v925
        %1014 = vst.msk [vmem:[%s986 + $0x141] sm:$0xff] %vm309, %v926
        %1015 = vst.msk [vmem:[%s986 + $0x151] sm:$0xff] %vm309, %v927
        %1016 = vst.msk [vmem:[%s986 + $0x159] sm:$0xff] %vm309, %v928
        %1017 = vst.msk [vmem:[%s986 + $0x169] sm:$0xff] %vm309, %v929
        %1018 = vst.msk [vmem:[%s986 + $0x171] sm:$0xff] %vm309, %v930
        %v1019 = vld [vmem:[#allocation2] sm:$0xff]
        %v1020 = vld [vmem:[#allocation2 + $0x8] sm:$0xff]
        %v1021 = vld [vmem:[#allocation2 + $0x10] sm:$0x3]
        %v1022 = vld [vmem:[#allocation2 + $0x18] sm:$0xff]
        %v1023 = vld [vmem:[#allocation2 + $0x20] sm:$0xff]
        %v1024 = vld [vmem:[#allocation2 + $0x28] sm:$0x3]
        %v1025 = vld [vmem:[#allocation2 + $0x30] sm:$0xff]
        %v1026 = vld [vmem:[#allocation2 + $0x38] sm:$0xff]
        %v1027 = vld [vmem:[#allocation2 + $0x40] sm:$0x3]
        %v1028 = vld [vmem:[#allocation2 + $0x48] sm:$0xff]
        %v1029 = vld [vmem:[#allocation2 + $0x50] sm:$0xff]
        %v1030 = vld [vmem:[#allocation2 + $0x58] sm:$0x3]
        %v1031 = vld [vmem:[#allocation2 + $0x60] sm:$0xff]
        %v1032 = vld [vmem:[#allocation2 + $0x68] sm:$0xff]
        %v1033 = vld [vmem:[#allocation2 + $0x70] sm:$0x3]
        %v1034 = vld [vmem:[#allocation2 + $0x78] sm:$0xff]
        %v1035 = vld [vmem:[#allocation2 + $0x80] sm:$0xff]
        %v1036 = vld [vmem:[#allocation2 + $0x88] sm:$0x3]
        %v1037 = vld [vmem:[#allocation2 + $0x90] sm:$0xff]
        %v1038 = vld [vmem:[#allocation2 + $0x98] sm:$0xff]
        %v1039 = vld [vmem:[#allocation2 + $0xa0] sm:$0x3]
        %v1040 = vld [vmem:[#allocation2 + $0xa8] sm:$0xff]
        %v1041 = vld [vmem:[#allocation2 + $0xb0] sm:$0xff]
        %v1042 = vld [vmem:[#allocation2 + $0xb8] sm:$0x3]
        %v1043 = vld [vmem:[#allocation2 + $0xc0] sm:$0xff]
        %v1044 = vld [vmem:[#allocation2 + $0xc8] sm:$0xff]
        %v1045 = vld [vmem:[#allocation2 + $0xd0] sm:$0x3]
        %v1046 = vld [vmem:[#allocation2 + $0xd8] sm:$0xff]
        %v1047 = vld [vmem:[#allocation2 + $0xe0] sm:$0xff]
        %v1048 = vld [vmem:[#allocation2 + $0xe8] sm:$0x3]
        %v1049 = vld [vmem:[#allocation2 + $0xf0] sm:$0xff]
        %v1050 = vld [vmem:[#allocation2 + $0xf8] sm:$0xff]
        %v1051 = vld [vmem:[#allocation2 + $0x100] sm:$0x3]
        %v1052 = vld [vmem:[#allocation2 + $0x108] sm:$0xff]
        %v1053 = vld [vmem:[#allocation2 + $0x110] sm:$0xff]
        %v1054 = vld [vmem:[#allocation2 + $0x118] sm:$0x3]
        %v1055 = vld [vmem:[#allocation2 + $0x120] sm:$0xff]
        %v1056 = vld [vmem:[#allocation2 + $0x128] sm:$0xff]
        %v1057 = vld [vmem:[#allocation2 + $0x130] sm:$0x3]
        %v1058 = vld [vmem:[#allocation2 + $0x138] sm:$0xff]
        %v1059 = vld [vmem:[#allocation2 + $0x140] sm:$0xff]
        %v1060 = vld [vmem:[#allocation2 + $0x148] sm:$0x3]
        %v1061 = vld [vmem:[#allocation2 + $0x150] sm:$0xff]
        %v1062 = vld [vmem:[#allocation2 + $0x158] sm:$0xff]
        %v1063 = vld [vmem:[#allocation2 + $0x160] sm:$0x3]
        %v1064 = vld [vmem:[#allocation2 + $0x168] sm:$0xff]
        %v1065 = vld [vmem:[#allocation2 + $0x170] sm:$0xff]
        %v1066 = vld [vmem:[#allocation2 + $0x178] sm:$0x3]
        %v1067 = vld [vmem:[#allocation2 + $0x180] sm:$0xff]
        %v1068 = vld [vmem:[#allocation2 + $0x188] sm:$0xff]
        %v1069 = vld [vmem:[#allocation2 + $0x190] sm:$0x3]
        %v1070 = vld [vmem:[#allocation2 + $0x198] sm:$0xff]
        %v1071 = vld [vmem:[#allocation2 + $0x1a0] sm:$0xff]
        %v1072 = vld [vmem:[#allocation2 + $0x1a8] sm:$0x3]
        %vm1121 = vcmask 1046528
        %v1122 = vrot.slane %v1019, 1
        %v1123 = vrot.slane %v1020, 1
        %v1124 = vsel %vm1121, %v1122, %v1123
        %v1125 = vrot.slane %v1021, 1
        %v1126 = vsel %vm1121, %v1123, %v1125
        %v1127 = vrot.slane %v1022, 1
        %v1128 = vrot.slane %v1023, 1
        %v1129 = vsel %vm1121, %v1127, %v1128
        %v1130 = vrot.slane %v1024, 1
        %v1131 = vsel %vm1121, %v1128, %v1130
        %v1132 = vrot.slane %v1025, 1
        %v1133 = vrot.slane %v1026, 1
        %v1134 = vsel %vm1121, %v1132, %v1133
        %v1135 = vrot.slane %v1027, 1
        %v1136 = vsel %vm1121, %v1133, %v1135
        %v1137 = vrot.slane %v1028, 1
        %v1138 = vrot.slane %v1029, 1
        %v1139 = vsel %vm1121, %v1137, %v1138
        %v1140 = vrot.slane %v1030, 1
        %v1141 = vsel %vm1121, %v1138, %v1140
        %v1142 = vrot.slane %v1031, 1
        %v1143 = vrot.slane %v1032, 1
        %v1144 = vsel %vm1121, %v1142, %v1143
        %v1145 = vrot.slane %v1033, 1
        %v1146 = vsel %vm1121, %v1143, %v1145
        %v1147 = vrot.slane %v1034, 1
        %v1148 = vrot.slane %v1035, 1
        %v1149 = vsel %vm1121, %v1147, %v1148
        %v1150 = vrot.slane %v1036, 1
        %v1151 = vsel %vm1121, %v1148, %v1150
        %v1152 = vrot.slane %v1037, 1
        %v1153 = vrot.slane %v1038, 1
        %v1154 = vsel %vm1121, %v1152, %v1153
        %v1155 = vrot.slane %v1039, 1
        %v1156 = vsel %vm1121, %v1153, %v1155
        %v1157 = vrot.slane %v1040, 1
        %v1158 = vrot.slane %v1041, 1
        %v1159 = vsel %vm1121, %v1157, %v1158
        %v1160 = vrot.slane %v1042, 1
        %v1161 = vsel %vm1121, %v1158, %v1160
        %v1162 = vrot.slane %v1043, 1
        %v1163 = vrot.slane %v1044, 1
        %v1164 = vsel %vm1121, %v1162, %v1163
        %v1165 = vrot.slane %v1045, 1
        %v1166 = vsel %vm1121, %v1163, %v1165
        %v1167 = vrot.slane %v1046, 1
        %v1168 = vrot.slane %v1047, 1
        %v1169 = vsel %vm1121, %v1167, %v1168
        %v1170 = vrot.slane %v1048, 1
        %v1171 = vsel %vm1121, %v1168, %v1170
        %v1172 = vrot.slane %v1049, 1
        %v1173 = vrot.slane %v1050, 1
        %v1174 = vsel %vm1121, %v1172, %v1173
        %v1175 = vrot.slane %v1051, 1
        %v1176 = vsel %vm1121, %v1173, %v1175
        %v1177 = vrot.slane %v1052, 1
        %v1178 = vrot.slane %v1053, 1
        %v1179 = vsel %vm1121, %v1177, %v1178
        %v1180 = vrot.slane %v1054, 1
        %v1181 = vsel %vm1121, %v1178, %v1180
        %v1182 = vrot.slane %v1055, 1
        %v1183 = vrot.slane %v1056, 1
        %v1184 = vsel %vm1121, %v1182, %v1183
        %v1185 = vrot.slane %v1057, 1
        %v1186 = vsel %vm1121, %v1183, %v1185
        %v1187 = vrot.slane %v1058, 1
        %v1188 = vrot.slane %v1059, 1
        %v1189 = vsel %vm1121, %v1187, %v1188
        %v1190 = vrot.slane %v1060, 1
        %v1191 = vsel %vm1121, %v1188, %v1190
        %v1192 = vrot.slane %v1061, 1
        %v1193 = vrot.slane %v1062, 1
        %v1194 = vsel %vm1121, %v1192, %v1193
        %v1195 = vrot.slane %v1063, 1
        %v1196 = vsel %vm1121, %v1193, %v1195
        %v1197 = vrot.slane %v1064, 1
        %v1198 = vrot.slane %v1065, 1
        %v1199 = vsel %vm1121, %v1197, %v1198
        %v1200 = vrot.slane %v1066, 1
        %v1201 = vsel %vm1121, %v1198, %v1200
        %vm1202 = vcmask 1045504
        %v1203 = vrot.slane %v1019, 2
        %v1204 = vrot.slane %v1020, 2
        %v1205 = vsel %vm1202, %v1203, %v1204
        %v1206 = vrot.slane %v1021, 2
        %v1207 = vsel %vm1202, %v1204, %v1206
        %v1208 = vrot.slane %v1022, 2
        %v1209 = vrot.slane %v1023, 2
        %v1210 = vsel %vm1202, %v1208, %v1209
        %v1211 = vrot.slane %v1024, 2
        %v1212 = vsel %vm1202, %v1209, %v1211
        %v1213 = vrot.slane %v1025, 2
        %v1214 = vrot.slane %v1026, 2
        %v1215 = vsel %vm1202, %v1213, %v1214
        %v1216 = vrot.slane %v1027, 2
        %v1217 = vsel %vm1202, %v1214, %v1216
        %v1218 = vrot.slane %v1028, 2
        %v1219 = vrot.slane %v1029, 2
        %v1220 = vsel %vm1202, %v1218, %v1219
        %v1221 = vrot.slane %v1030, 2
        %v1222 = vsel %vm1202, %v1219, %v1221
        %v1223 = vrot.slane %v1031, 2
        %v1224 = vrot.slane %v1032, 2
        %v1225 = vsel %vm1202, %v1223, %v1224
        %v1226 = vrot.slane %v1033, 2
        %v1227 = vsel %vm1202, %v1224, %v1226
        %v1228 = vrot.slane %v1034, 2
        %v1229 = vrot.slane %v1035, 2
        %v1230 = vsel %vm1202, %v1228, %v1229
        %v1231 = vrot.slane %v1036, 2
        %v1232 = vsel %vm1202, %v1229, %v1231
        %v1233 = vrot.slane %v1037, 2
        %v1234 = vrot.slane %v1038, 2
        %v1235 = vsel %vm1202, %v1233, %v1234
        %v1236 = vrot.slane %v1039, 2
        %v1237 = vsel %vm1202, %v1234, %v1236
        %v1238 = vrot.slane %v1040, 2
        %v1239 = vrot.slane %v1041, 2
        %v1240 = vsel %vm1202, %v1238, %v1239
        %v1241 = vrot.slane %v1042, 2
        %v1242 = vsel %vm1202, %v1239, %v1241
        %v1243 = vrot.slane %v1043, 2
        %v1244 = vrot.slane %v1044, 2
        %v1245 = vsel %vm1202, %v1243, %v1244
        %v1246 = vrot.slane %v1045, 2
        %v1247 = vsel %vm1202, %v1244, %v1246
        %v1248 = vrot.slane %v1046, 2
        %v1249 = vrot.slane %v1047, 2
        %v1250 = vsel %vm1202, %v1248, %v1249
        %v1251 = vrot.slane %v1048, 2
        %v1252 = vsel %vm1202, %v1249, %v1251
        %v1253 = vrot.slane %v1049, 2
        %v1254 = vrot.slane %v1050, 2
        %v1255 = vsel %vm1202, %v1253, %v1254
        %v1256 = vrot.slane %v1051, 2
        %v1257 = vsel %vm1202, %v1254, %v1256
        %v1258 = vrot.slane %v1052, 2
        %v1259 = vrot.slane %v1053, 2
        %v1260 = vsel %vm1202, %v1258, %v1259
        %v1261 = vrot.slane %v1054, 2
        %v1262 = vsel %vm1202, %v1259, %v1261
        %v1263 = vrot.slane %v1055, 2
        %v1264 = vrot.slane %v1056, 2
        %v1265 = vsel %vm1202, %v1263, %v1264
        %v1266 = vrot.slane %v1057, 2
        %v1267 = vsel %vm1202, %v1264, %v1266
        %v1268 = vrot.slane %v1058, 2
        %v1269 = vrot.slane %v1059, 2
        %v1270 = vsel %vm1202, %v1268, %v1269
        %v1271 = vrot.slane %v1060, 2
        %v1272 = vsel %vm1202, %v1269, %v1271
        %v1273 = vrot.slane %v1061, 2
        %v1274 = vrot.slane %v1062, 2
        %v1275 = vsel %vm1202, %v1273, %v1274
        %v1276 = vrot.slane %v1063, 2
        %v1277 = vsel %vm1202, %v1274, %v1276
        %v1278 = vrot.slane %v1064, 2
        %v1279 = vrot.slane %v1065, 2
        %v1280 = vsel %vm1202, %v1278, %v1279
        %v1281 = vrot.slane %v1066, 2
        %v1282 = vsel %vm1202, %v1279, %v1281
        %v1286 = vrot.slane %v1067, 1
        %v1287 = vrot.slane %v1068, 1
        %v1288 = vsel %vm1121, %v1286, %v1287
        %v1289 = vrot.slane %v1069, 1
        %v1290 = vsel %vm1121, %v1287, %v1289
        %v1323 = vrot.slane %v1067, 2
        %v1324 = vrot.slane %v1068, 2
        %v1325 = vsel %vm1202, %v1323, %v1324
        %v1326 = vrot.slane %v1069, 2
        %v1327 = vsel %vm1202, %v1324, %v1326
        %v1331 = vrot.slane %v1070, 1
        %v1332 = vrot.slane %v1071, 1
        %v1333 = vsel %vm1121, %v1331, %v1332
        %v1334 = vrot.slane %v1072, 1
        %v1335 = vsel %vm1121, %v1332, %v1334
        %v1336 = vrot.slane %v1070, 2
        %v1337 = vrot.slane %v1071, 2
        %v1338 = vsel %vm1202, %v1336, %v1337
        %v1339 = vrot.slane %v1072, 2
        %v1340 = vsel %vm1202, %v1337, %v1339
        %1373 = vrot.lane.b32.xlu0 %v1124, 32
        %v1374 = vpop.permute.xlu0 %1373
        %1375 = vrot.lane.b32.xlu0 %v1126, 32
        %v1376 = vpop.permute.xlu0 %1375
        %1377 = vrot.lane.b32.xlu0 %v1129, 32
        %v1378 = vpop.permute.xlu0 %1377
        %1379 = vrot.lane.b32.xlu0 %v1131, 32
        %v1380 = vpop.permute.xlu0 %1379
        %1381 = vrot.lane.b32.xlu0 %v1134, 32
        %v1382 = vpop.permute.xlu0 %1381
        %1383 = vrot.lane.b32.xlu0 %v1136, 32
        %v1384 = vpop.permute.xlu0 %1383
        %1385 = vrot.lane.b32.xlu0 %v1139, 32
        %v1386 = vpop.permute.xlu0 %1385
        %1387 = vrot.lane.b32.xlu0 %v1141, 32
        %v1388 = vpop.permute.xlu0 %1387
        %1389 = vrot.lane.b32.xlu0 %v1144, 32
        %v1390 = vpop.permute.xlu0 %1389
        %1391 = vrot.lane.b32.xlu0 %v1146, 32
        %v1392 = vpop.permute.xlu0 %1391
        %1393 = vrot.lane.b32.xlu0 %v1149, 32
        %v1394 = vpop.permute.xlu0 %1393
        %1395 = vrot.lane.b32.xlu0 %v1151, 32
        %v1396 = vpop.permute.xlu0 %1395
        %1397 = vrot.lane.b32.xlu0 %v1154, 32
        %v1398 = vpop.permute.xlu0 %1397
        %1399 = vrot.lane.b32.xlu0 %v1156, 32
        %v1400 = vpop.permute.xlu0 %1399
        %1401 = vrot.lane.b32.xlu0 %v1159, 32
        %v1402 = vpop.permute.xlu0 %1401
        %1403 = vrot.lane.b32.xlu0 %v1161, 32
        %v1404 = vpop.permute.xlu0 %1403
        %1405 = vrot.lane.b32.xlu0 %v1164, 32
        %v1406 = vpop.permute.xlu0 %1405
        %1407 = vrot.lane.b32.xlu0 %v1166, 32
        %v1408 = vpop.permute.xlu0 %1407
        %1409 = vrot.lane.b32.xlu0 %v1169, 32
        %v1410 = vpop.permute.xlu0 %1409
        %1411 = vrot.lane.b32.xlu0 %v1171, 32
        %v1412 = vpop.permute.xlu0 %1411
        %1413 = vrot.lane.b32.xlu0 %v1174, 32
        %v1414 = vpop.permute.xlu0 %1413
        %1415 = vrot.lane.b32.xlu0 %v1176, 32
        %v1416 = vpop.permute.xlu0 %1415
        %1417 = vrot.lane.b32.xlu0 %v1179, 32
        %v1418 = vpop.permute.xlu0 %1417
        %1419 = vrot.lane.b32.xlu0 %v1181, 32
        %v1420 = vpop.permute.xlu0 %1419
        %1421 = vrot.lane.b32.xlu0 %v1184, 32
        %v1422 = vpop.permute.xlu0 %1421
        %1423 = vrot.lane.b32.xlu0 %v1186, 32
        %v1424 = vpop.permute.xlu0 %1423
        %1425 = vrot.lane.b32.xlu0 %v1189, 32
        %v1426 = vpop.permute.xlu0 %1425
        %1427 = vrot.lane.b32.xlu0 %v1191, 32
        %v1428 = vpop.permute.xlu0 %1427
        %1429 = vrot.lane.b32.xlu0 %v1194, 32
        %v1430 = vpop.permute.xlu0 %1429
        %1431 = vrot.lane.b32.xlu0 %v1196, 32
        %v1432 = vpop.permute.xlu0 %1431
        %1433 = vrot.lane.b32.xlu0 %v1199, 32
        %v1434 = vpop.permute.xlu0 %1433
        %1435 = vrot.lane.b32.xlu0 %v1201, 32
        %v1436 = vpop.permute.xlu0 %1435
        %1469 = vrot.lane.b32.xlu0 %v1205, 64
        %v1470 = vpop.permute.xlu0 %1469
        %1471 = vrot.lane.b32.xlu0 %v1207, 64
        %v1472 = vpop.permute.xlu0 %1471
        %1473 = vrot.lane.b32.xlu0 %v1210, 64
        %v1474 = vpop.permute.xlu0 %1473
        %1475 = vrot.lane.b32.xlu0 %v1212, 64
        %v1476 = vpop.permute.xlu0 %1475
        %1477 = vrot.lane.b32.xlu0 %v1215, 64
        %v1478 = vpop.permute.xlu0 %1477
        %1479 = vrot.lane.b32.xlu0 %v1217, 64
        %v1480 = vpop.permute.xlu0 %1479
        %1481 = vrot.lane.b32.xlu0 %v1220, 64
        %v1482 = vpop.permute.xlu0 %1481
        %1483 = vrot.lane.b32.xlu0 %v1222, 64
        %v1484 = vpop.permute.xlu0 %1483
        %1485 = vrot.lane.b32.xlu0 %v1225, 64
        %v1486 = vpop.permute.xlu0 %1485
        %1487 = vrot.lane.b32.xlu0 %v1227, 64
        %v1488 = vpop.permute.xlu0 %1487
        %1489 = vrot.lane.b32.xlu0 %v1230, 64
        %v1490 = vpop.permute.xlu0 %1489
        %1491 = vrot.lane.b32.xlu0 %v1232, 64
        %v1492 = vpop.permute.xlu0 %1491
        %1493 = vrot.lane.b32.xlu0 %v1235, 64
        %v1494 = vpop.permute.xlu0 %1493
        %1495 = vrot.lane.b32.xlu0 %v1237, 64
        %v1496 = vpop.permute.xlu0 %1495
        %1497 = vrot.lane.b32.xlu0 %v1240, 64
        %v1498 = vpop.permute.xlu0 %1497
        %1499 = vrot.lane.b32.xlu0 %v1242, 64
        %v1500 = vpop.permute.xlu0 %1499
        %1501 = vrot.lane.b32.xlu0 %v1245, 64
        %v1502 = vpop.permute.xlu0 %1501
        %1503 = vrot.lane.b32.xlu0 %v1247, 64
        %v1504 = vpop.permute.xlu0 %1503
        %1505 = vrot.lane.b32.xlu0 %v1250, 64
        %v1506 = vpop.permute.xlu0 %1505
        %1507 = vrot.lane.b32.xlu0 %v1252, 64
        %v1508 = vpop.permute.xlu0 %1507
        %1509 = vrot.lane.b32.xlu0 %v1255, 64
        %v1510 = vpop.permute.xlu0 %1509
        %1511 = vrot.lane.b32.xlu0 %v1257, 64
        %v1512 = vpop.permute.xlu0 %1511
        %1513 = vrot.lane.b32.xlu0 %v1260, 64
        %v1514 = vpop.permute.xlu0 %1513
        %1515 = vrot.lane.b32.xlu0 %v1262, 64
        %v1516 = vpop.permute.xlu0 %1515
        %1517 = vrot.lane.b32.xlu0 %v1265, 64
        %v1518 = vpop.permute.xlu0 %1517
        %1519 = vrot.lane.b32.xlu0 %v1267, 64
        %v1520 = vpop.permute.xlu0 %1519
        %1521 = vrot.lane.b32.xlu0 %v1270, 64
        %v1522 = vpop.permute.xlu0 %1521
        %1523 = vrot.lane.b32.xlu0 %v1272, 64
        %v1524 = vpop.permute.xlu0 %1523
        %1525 = vrot.lane.b32.xlu0 %v1275, 64
        %v1526 = vpop.permute.xlu0 %1525
        %1527 = vrot.lane.b32.xlu0 %v1277, 64
        %v1528 = vpop.permute.xlu0 %1527
        %1529 = vrot.lane.b32.xlu0 %v1280, 64
        %v1530 = vpop.permute.xlu0 %1529
        %1531 = vrot.lane.b32.xlu0 %v1282, 64
        %v1532 = vpop.permute.xlu0 %1531
        %1565 = vrot.lane.b32.xlu0 %v1022, 96
        %v1566 = vpop.permute.xlu0 %1565
        %1567 = vrot.lane.b32.xlu0 %v1023, 96
        %v1568 = vpop.permute.xlu0 %1567
        %1569 = vrot.lane.b32.xlu0 %v1025, 96
        %v1570 = vpop.permute.xlu0 %1569
        %1571 = vrot.lane.b32.xlu0 %v1026, 96
        %v1572 = vpop.permute.xlu0 %1571
        %1573 = vrot.lane.b32.xlu0 %v1028, 96
        %v1574 = vpop.permute.xlu0 %1573
        %1575 = vrot.lane.b32.xlu0 %v1029, 96
        %v1576 = vpop.permute.xlu0 %1575
        %1577 = vrot.lane.b32.xlu0 %v1031, 96
        %v1578 = vpop.permute.xlu0 %1577
        %1579 = vrot.lane.b32.xlu0 %v1032, 96
        %v1580 = vpop.permute.xlu0 %1579
        %1581 = vrot.lane.b32.xlu0 %v1034, 96
        %v1582 = vpop.permute.xlu0 %1581
        %1583 = vrot.lane.b32.xlu0 %v1035, 96
        %v1584 = vpop.permute.xlu0 %1583
        %1585 = vrot.lane.b32.xlu0 %v1037, 96
        %v1586 = vpop.permute.xlu0 %1585
        %1587 = vrot.lane.b32.xlu0 %v1038, 96
        %v1588 = vpop.permute.xlu0 %1587
        %1589 = vrot.lane.b32.xlu0 %v1040, 96
        %v1590 = vpop.permute.xlu0 %1589
        %1591 = vrot.lane.b32.xlu0 %v1041, 96
        %v1592 = vpop.permute.xlu0 %1591
        %1593 = vrot.lane.b32.xlu0 %v1043, 96
        %v1594 = vpop.permute.xlu0 %1593
        %1595 = vrot.lane.b32.xlu0 %v1044, 96
        %v1596 = vpop.permute.xlu0 %1595
        %1597 = vrot.lane.b32.xlu0 %v1046, 96
        %v1598 = vpop.permute.xlu0 %1597
        %1599 = vrot.lane.b32.xlu0 %v1047, 96
        %v1600 = vpop.permute.xlu0 %1599
        %1601 = vrot.lane.b32.xlu0 %v1049, 96
        %v1602 = vpop.permute.xlu0 %1601
        %1603 = vrot.lane.b32.xlu0 %v1050, 96
        %v1604 = vpop.permute.xlu0 %1603
        %1605 = vrot.lane.b32.xlu0 %v1052, 96
        %v1606 = vpop.permute.xlu0 %1605
        %1607 = vrot.lane.b32.xlu0 %v1053, 96
        %v1608 = vpop.permute.xlu0 %1607
        %1609 = vrot.lane.b32.xlu0 %v1055, 96
        %v1610 = vpop.permute.xlu0 %1609
        %1611 = vrot.lane.b32.xlu0 %v1056, 96
        %v1612 = vpop.permute.xlu0 %1611
        %1613 = vrot.lane.b32.xlu0 %v1058, 96
        %v1614 = vpop.permute.xlu0 %1613
        %1615 = vrot.lane.b32.xlu0 %v1059, 96
        %v1616 = vpop.permute.xlu0 %1615
        %1617 = vrot.lane.b32.xlu0 %v1061, 96
        %v1618 = vpop.permute.xlu0 %1617
        %1619 = vrot.lane.b32.xlu0 %v1062, 96
        %v1620 = vpop.permute.xlu0 %1619
        %1621 = vrot.lane.b32.xlu0 %v1064, 96
        %v1622 = vpop.permute.xlu0 %1621
        %1623 = vrot.lane.b32.xlu0 %v1065, 96
        %v1624 = vpop.permute.xlu0 %1623
        %1625 = vrot.lane.b32.xlu0 %v1067, 96
        %v1626 = vpop.permute.xlu0 %1625
        %1627 = vrot.lane.b32.xlu0 %v1068, 96
        %v1628 = vpop.permute.xlu0 %1627
        %1661 = vrot.lane.b32.xlu0 %v1210, 32
        %v1662 = vpop.permute.xlu0 %1661
        %1663 = vrot.lane.b32.xlu0 %v1212, 32
        %v1664 = vpop.permute.xlu0 %1663
        %1665 = vrot.lane.b32.xlu0 %v1215, 32
        %v1666 = vpop.permute.xlu0 %1665
        %1667 = vrot.lane.b32.xlu0 %v1217, 32
        %v1668 = vpop.permute.xlu0 %1667
        %1669 = vrot.lane.b32.xlu0 %v1220, 32
        %v1670 = vpop.permute.xlu0 %1669
        %1671 = vrot.lane.b32.xlu0 %v1222, 32
        %v1672 = vpop.permute.xlu0 %1671
        %1673 = vrot.lane.b32.xlu0 %v1225, 32
        %v1674 = vpop.permute.xlu0 %1673
        %1675 = vrot.lane.b32.xlu0 %v1227, 32
        %v1676 = vpop.permute.xlu0 %1675
        %1677 = vrot.lane.b32.xlu0 %v1230, 32
        %v1678 = vpop.permute.xlu0 %1677
        %1679 = vrot.lane.b32.xlu0 %v1232, 32
        %v1680 = vpop.permute.xlu0 %1679
        %1681 = vrot.lane.b32.xlu0 %v1235, 32
        %v1682 = vpop.permute.xlu0 %1681
        %1683 = vrot.lane.b32.xlu0 %v1237, 32
        %v1684 = vpop.permute.xlu0 %1683
        %1685 = vrot.lane.b32.xlu0 %v1240, 32
        %v1686 = vpop.permute.xlu0 %1685
        %1687 = vrot.lane.b32.xlu0 %v1242, 32
        %v1688 = vpop.permute.xlu0 %1687
        %1689 = vrot.lane.b32.xlu0 %v1245, 32
        %v1690 = vpop.permute.xlu0 %1689
        %1691 = vrot.lane.b32.xlu0 %v1247, 32
        %v1692 = vpop.permute.xlu0 %1691
        %1693 = vrot.lane.b32.xlu0 %v1250, 32
        %v1694 = vpop.permute.xlu0 %1693
        %1695 = vrot.lane.b32.xlu0 %v1252, 32
        %v1696 = vpop.permute.xlu0 %1695
        %1697 = vrot.lane.b32.xlu0 %v1255, 32
        %v1698 = vpop.permute.xlu0 %1697
        %1699 = vrot.lane.b32.xlu0 %v1257, 32
        %v1700 = vpop.permute.xlu0 %1699
        %1701 = vrot.lane.b32.xlu0 %v1260, 32
        %v1702 = vpop.permute.xlu0 %1701
        %1703 = vrot.lane.b32.xlu0 %v1262, 32
        %v1704 = vpop.permute.xlu0 %1703
        %1705 = vrot.lane.b32.xlu0 %v1265, 32
        %v1706 = vpop.permute.xlu0 %1705
        %1707 = vrot.lane.b32.xlu0 %v1267, 32
        %v1708 = vpop.permute.xlu0 %1707
        %1709 = vrot.lane.b32.xlu0 %v1270, 32
        %v1710 = vpop.permute.xlu0 %1709
        %1711 = vrot.lane.b32.xlu0 %v1272, 32
        %v1712 = vpop.permute.xlu0 %1711
        %1713 = vrot.lane.b32.xlu0 %v1275, 32
        %v1714 = vpop.permute.xlu0 %1713
        %1715 = vrot.lane.b32.xlu0 %v1277, 32
        %v1716 = vpop.permute.xlu0 %1715
        %1717 = vrot.lane.b32.xlu0 %v1280, 32
        %v1718 = vpop.permute.xlu0 %1717
        %1719 = vrot.lane.b32.xlu0 %v1282, 32
        %v1720 = vpop.permute.xlu0 %1719
        %1721 = vrot.lane.b32.xlu0 %v1325, 32
        %v1722 = vpop.permute.xlu0 %1721
        %1723 = vrot.lane.b32.xlu0 %v1327, 32
        %v1724 = vpop.permute.xlu0 %1723
        %1757 = vrot.lane.b32.xlu0 %v1025, 64
        %v1758 = vpop.permute.xlu0 %1757
        %1759 = vrot.lane.b32.xlu0 %v1026, 64
        %v1760 = vpop.permute.xlu0 %1759
        %1761 = vrot.lane.b32.xlu0 %v1028, 64
        %v1762 = vpop.permute.xlu0 %1761
        %1763 = vrot.lane.b32.xlu0 %v1029, 64
        %v1764 = vpop.permute.xlu0 %1763
        %1765 = vrot.lane.b32.xlu0 %v1031, 64
        %v1766 = vpop.permute.xlu0 %1765
        %1767 = vrot.lane.b32.xlu0 %v1032, 64
        %v1768 = vpop.permute.xlu0 %1767
        %1769 = vrot.lane.b32.xlu0 %v1034, 64
        %v1770 = vpop.permute.xlu0 %1769
        %1771 = vrot.lane.b32.xlu0 %v1035, 64
        %v1772 = vpop.permute.xlu0 %1771
        %1773 = vrot.lane.b32.xlu0 %v1037, 64
        %v1774 = vpop.permute.xlu0 %1773
        %1775 = vrot.lane.b32.xlu0 %v1038, 64
        %v1776 = vpop.permute.xlu0 %1775
        %1777 = vrot.lane.b32.xlu0 %v1040, 64
        %v1778 = vpop.permute.xlu0 %1777
        %1779 = vrot.lane.b32.xlu0 %v1041, 64
        %v1780 = vpop.permute.xlu0 %1779
        %1781 = vrot.lane.b32.xlu0 %v1043, 64
        %v1782 = vpop.permute.xlu0 %1781
        %1783 = vrot.lane.b32.xlu0 %v1044, 64
        %v1784 = vpop.permute.xlu0 %1783
        %1785 = vrot.lane.b32.xlu0 %v1046, 64
        %v1786 = vpop.permute.xlu0 %1785
        %1787 = vrot.lane.b32.xlu0 %v1047, 64
        %v1788 = vpop.permute.xlu0 %1787
        %1789 = vrot.lane.b32.xlu0 %v1049, 64
        %v1790 = vpop.permute.xlu0 %1789
        %1791 = vrot.lane.b32.xlu0 %v1050, 64
        %v1792 = vpop.permute.xlu0 %1791
        %1793 = vrot.lane.b32.xlu0 %v1052, 64
        %v1794 = vpop.permute.xlu0 %1793
        %1795 = vrot.lane.b32.xlu0 %v1053, 64
        %v1796 = vpop.permute.xlu0 %1795
        %1797 = vrot.lane.b32.xlu0 %v1055, 64
        %v1798 = vpop.permute.xlu0 %1797
        %1799 = vrot.lane.b32.xlu0 %v1056, 64
        %v1800 = vpop.permute.xlu0 %1799
        %1801 = vrot.lane.b32.xlu0 %v1058, 64
        %v1802 = vpop.permute.xlu0 %1801
        %1803 = vrot.lane.b32.xlu0 %v1059, 64
        %v1804 = vpop.permute.xlu0 %1803
        %1805 = vrot.lane.b32.xlu0 %v1061, 64
        %v1806 = vpop.permute.xlu0 %1805
        %1807 = vrot.lane.b32.xlu0 %v1062, 64
        %v1808 = vpop.permute.xlu0 %1807
        %1809 = vrot.lane.b32.xlu0 %v1064, 64
        %v1810 = vpop.permute.xlu0 %1809
        %1811 = vrot.lane.b32.xlu0 %v1065, 64
        %v1812 = vpop.permute.xlu0 %1811
        %1813 = vrot.lane.b32.xlu0 %v1067, 64
        %v1814 = vpop.permute.xlu0 %1813
        %1815 = vrot.lane.b32.xlu0 %v1068, 64
        %v1816 = vpop.permute.xlu0 %1815
        %1817 = vrot.lane.b32.xlu0 %v1070, 64
        %v1818 = vpop.permute.xlu0 %1817
        %1819 = vrot.lane.b32.xlu0 %v1071, 64
        %v1820 = vpop.permute.xlu0 %1819
        %1853 = vrot.lane.b32.xlu0 %v1134, 96
        %v1854 = vpop.permute.xlu0 %1853
        %1855 = vrot.lane.b32.xlu0 %v1136, 96
        %v1856 = vpop.permute.xlu0 %1855
        %1857 = vrot.lane.b32.xlu0 %v1139, 96
        %v1858 = vpop.permute.xlu0 %1857
        %1859 = vrot.lane.b32.xlu0 %v1141, 96
        %v1860 = vpop.permute.xlu0 %1859
        %1861 = vrot.lane.b32.xlu0 %v1144, 96
        %v1862 = vpop.permute.xlu0 %1861
        %1863 = vrot.lane.b32.xlu0 %v1146, 96
        %v1864 = vpop.permute.xlu0 %1863
        %1865 = vrot.lane.b32.xlu0 %v1149, 96
        %v1866 = vpop.permute.xlu0 %1865
        %1867 = vrot.lane.b32.xlu0 %v1151, 96
        %v1868 = vpop.permute.xlu0 %1867
        %1869 = vrot.lane.b32.xlu0 %v1154, 96
        %v1870 = vpop.permute.xlu0 %1869
        %1871 = vrot.lane.b32.xlu0 %v1156, 96
        %v1872 = vpop.permute.xlu0 %1871
        %1873 = vrot.lane.b32.xlu0 %v1159, 96
        %v1874 = vpop.permute.xlu0 %1873
        %1875 = vrot.lane.b32.xlu0 %v1161, 96
        %v1876 = vpop.permute.xlu0 %1875
        %1877 = vrot.lane.b32.xlu0 %v1164, 96
        %v1878 = vpop.permute.xlu0 %1877
        %1879 = vrot.lane.b32.xlu0 %v1166, 96
        %v1880 = vpop.permute.xlu0 %1879
        %1881 = vrot.lane.b32.xlu0 %v1169, 96
        %v1882 = vpop.permute.xlu0 %1881
        %1883 = vrot.lane.b32.xlu0 %v1171, 96
        %v1884 = vpop.permute.xlu0 %1883
        %1885 = vrot.lane.b32.xlu0 %v1174, 96
        %v1886 = vpop.permute.xlu0 %1885
        %1887 = vrot.lane.b32.xlu0 %v1176, 96
        %v1888 = vpop.permute.xlu0 %1887
        %1889 = vrot.lane.b32.xlu0 %v1179, 96
        %v1890 = vpop.permute.xlu0 %1889
        %1891 = vrot.lane.b32.xlu0 %v1181, 96
        %v1892 = vpop.permute.xlu0 %1891
        %1893 = vrot.lane.b32.xlu0 %v1184, 96
        %v1894 = vpop.permute.xlu0 %1893
        %1895 = vrot.lane.b32.xlu0 %v1186, 96
        %v1896 = vpop.permute.xlu0 %1895
        %1897 = vrot.lane.b32.xlu0 %v1189, 96
        %v1898 = vpop.permute.xlu0 %1897
        %1899 = vrot.lane.b32.xlu0 %v1191, 96
        %v1900 = vpop.permute.xlu0 %1899
        %1901 = vrot.lane.b32.xlu0 %v1194, 96
        %v1902 = vpop.permute.xlu0 %1901
        %1903 = vrot.lane.b32.xlu0 %v1196, 96
        %v1904 = vpop.permute.xlu0 %1903
        %1905 = vrot.lane.b32.xlu0 %v1199, 96
        %v1906 = vpop.permute.xlu0 %1905
        %1907 = vrot.lane.b32.xlu0 %v1201, 96
        %v1908 = vpop.permute.xlu0 %1907
        %1909 = vrot.lane.b32.xlu0 %v1288, 96
        %v1910 = vpop.permute.xlu0 %1909
        %1911 = vrot.lane.b32.xlu0 %v1290, 96
        %v1912 = vpop.permute.xlu0 %1911
        %1913 = vrot.lane.b32.xlu0 %v1333, 96
        %v1914 = vpop.permute.xlu0 %1913
        %1915 = vrot.lane.b32.xlu0 %v1335, 96
        %v1916 = vpop.permute.xlu0 %1915
        %v1949 = vsel %vm309, %v1019, %v1374
        %v1950 = vsel %vm309, %v1020, %v1376
        %v1951 = vsel %vm309, %v1022, %v1378
        %v1952 = vsel %vm309, %v1023, %v1380
        %v1953 = vsel %vm309, %v1025, %v1382
        %v1954 = vsel %vm309, %v1026, %v1384
        %v1955 = vsel %vm309, %v1028, %v1386
        %v1956 = vsel %vm309, %v1029, %v1388
        %v1957 = vsel %vm309, %v1031, %v1390
        %v1958 = vsel %vm309, %v1032, %v1392
        %v1959 = vsel %vm309, %v1034, %v1394
        %v1960 = vsel %vm309, %v1035, %v1396
        %v1961 = vsel %vm309, %v1037, %v1398
        %v1962 = vsel %vm309, %v1038, %v1400
        %v1963 = vsel %vm309, %v1040, %v1402
        %v1964 = vsel %vm309, %v1041, %v1404
        %v1965 = vsel %vm309, %v1043, %v1406
        %v1966 = vsel %vm309, %v1044, %v1408
        %v1967 = vsel %vm309, %v1046, %v1410
        %v1968 = vsel %vm309, %v1047, %v1412
        %v1969 = vsel %vm309, %v1049, %v1414
        %v1970 = vsel %vm309, %v1050, %v1416
        %v1971 = vsel %vm309, %v1052, %v1418
        %v1972 = vsel %vm309, %v1053, %v1420
        %v1973 = vsel %vm309, %v1055, %v1422
        %v1974 = vsel %vm309, %v1056, %v1424
        %v1975 = vsel %vm309, %v1058, %v1426
        %v1976 = vsel %vm309, %v1059, %v1428
        %v1977 = vsel %vm309, %v1061, %v1430
        %v1978 = vsel %vm309, %v1062, %v1432
        %v1979 = vsel %vm309, %v1064, %v1434
        %v1980 = vsel %vm309, %v1065, %v1436
        %vm1981 = vcmask 523264
        %v1982 = vsel %vm1981, %v1949, %v1470
        %v1983 = vsel %vm1981, %v1950, %v1472
        %v1984 = vsel %vm1981, %v1951, %v1474
        %v1985 = vsel %vm1981, %v1952, %v1476
        %v1986 = vsel %vm1981, %v1953, %v1478
        %v1987 = vsel %vm1981, %v1954, %v1480
        %v1988 = vsel %vm1981, %v1955, %v1482
        %v1989 = vsel %vm1981, %v1956, %v1484
        %v1990 = vsel %vm1981, %v1957, %v1486
        %v1991 = vsel %vm1981, %v1958, %v1488
        %v1992 = vsel %vm1981, %v1959, %v1490
        %v1993 = vsel %vm1981, %v1960, %v1492
        %v1994 = vsel %vm1981, %v1961, %v1494
        %v1995 = vsel %vm1981, %v1962, %v1496
        %v1996 = vsel %vm1981, %v1963, %v1498
        %v1997 = vsel %vm1981, %v1964, %v1500
        %v1998 = vsel %vm1981, %v1965, %v1502
        %v1999 = vsel %vm1981, %v1966, %v1504
        %v2000 = vsel %vm1981, %v1967, %v1506
        %v2001 = vsel %vm1981, %v1968, %v1508
        %v2002 = vsel %vm1981, %v1969, %v1510
        %v2003 = vsel %vm1981, %v1970, %v1512
        %v2004 = vsel %vm1981, %v1971, %v1514
        %v2005 = vsel %vm1981, %v1972, %v1516
        %v2006 = vsel %vm1981, %v1973, %v1518
        %v2007 = vsel %vm1981, %v1974, %v1520
        %v2008 = vsel %vm1981, %v1975, %v1522
        %v2009 = vsel %vm1981, %v1976, %v1524
        %v2010 = vsel %vm1981, %v1977, %v1526
        %v2011 = vsel %vm1981, %v1978, %v1528
        %v2012 = vsel %vm1981, %v1979, %v1530
        %v2013 = vsel %vm1981, %v1980, %v1532
        %vm2014 = vcmask 785408
        %v2015 = vsel %vm2014, %v1982, %v1566
        %v2016 = vsel %vm2014, %v1983, %v1568
        %v2017 = vsel %vm2014, %v1984, %v1570
        %v2018 = vsel %vm2014, %v1985, %v1572
        %v2019 = vsel %vm2014, %v1986, %v1574
        %v2020 = vsel %vm2014, %v1987, %v1576
        %v2021 = vsel %vm2014, %v1988, %v1578
        %v2022 = vsel %vm2014, %v1989, %v1580
        %v2023 = vsel %vm2014, %v1990, %v1582
        %v2024 = vsel %vm2014, %v1991, %v1584
        %v2025 = vsel %vm2014, %v1992, %v1586
        %v2026 = vsel %vm2014, %v1993, %v1588
        %v2027 = vsel %vm2014, %v1994, %v1590
        %v2028 = vsel %vm2014, %v1995, %v1592
        %v2029 = vsel %vm2014, %v1996, %v1594
        %v2030 = vsel %vm2014, %v1997, %v1596
        %v2031 = vsel %vm2014, %v1998, %v1598
        %v2032 = vsel %vm2014, %v1999, %v1600
        %v2033 = vsel %vm2014, %v2000, %v1602
        %v2034 = vsel %vm2014, %v2001, %v1604
        %v2035 = vsel %vm2014, %v2002, %v1606
        %v2036 = vsel %vm2014, %v2003, %v1608
        %v2037 = vsel %vm2014, %v2004, %v1610
        %v2038 = vsel %vm2014, %v2005, %v1612
        %v2039 = vsel %vm2014, %v2006, %v1614
        %v2040 = vsel %vm2014, %v2007, %v1616
        %v2041 = vsel %vm2014, %v2008, %v1618
        %v2042 = vsel %vm2014, %v2009, %v1620
        %v2043 = vsel %vm2014, %v2010, %v1622
        %v2044 = vsel %vm2014, %v2011, %v1624
        %v2045 = vsel %vm2014, %v2012, %v1626
        %v2046 = vsel %vm2014, %v2013, %v1628
        %v2047 = vsel %vm309, %v1129, %v1662
        %v2048 = vsel %vm309, %v1131, %v1664
        %v2049 = vsel %vm309, %v1134, %v1666
        %v2050 = vsel %vm309, %v1136, %v1668
        %v2051 = vsel %vm309, %v1139, %v1670
        %v2052 = vsel %vm309, %v1141, %v1672
        %v2053 = vsel %vm309, %v1144, %v1674
        %v2054 = vsel %vm309, %v1146, %v1676
        %v2055 = vsel %vm309, %v1149, %v1678
        %v2056 = vsel %vm309, %v1151, %v1680
        %v2057 = vsel %vm309, %v1154, %v1682
        %v2058 = vsel %vm309, %v1156, %v1684
        %v2059 = vsel %vm309, %v1159, %v1686
        %v2060 = vsel %vm309, %v1161, %v1688
        %v2061 = vsel %vm309, %v1164, %v1690
        %v2062 = vsel %vm309, %v1166, %v1692
        %v2063 = vsel %vm309, %v1169, %v1694
        %v2064 = vsel %vm309, %v1171, %v1696
        %v2065 = vsel %vm309, %v1174, %v1698
        %v2066 = vsel %vm309, %v1176, %v1700
        %v2067 = vsel %vm309, %v1179, %v1702
        %v2068 = vsel %vm309, %v1181, %v1704
        %v2069 = vsel %vm309, %v1184, %v1706
        %v2070 = vsel %vm309, %v1186, %v1708
        %v2071 = vsel %vm309, %v1189, %v1710
        %v2072 = vsel %vm309, %v1191, %v1712
        %v2073 = vsel %vm309, %v1194, %v1714
        %v2074 = vsel %vm309, %v1196, %v1716
        %v2075 = vsel %vm309, %v1199, %v1718
        %v2076 = vsel %vm309, %v1201, %v1720
        %v2077 = vsel %vm309, %v1288, %v1722
        %v2078 = vsel %vm309, %v1290, %v1724
        %v2079 = vsel %vm1981, %v2047, %v1758
        %v2080 = vsel %vm1981, %v2048, %v1760
        %v2081 = vsel %vm1981, %v2049, %v1762
        %v2082 = vsel %vm1981, %v2050, %v1764
        %v2083 = vsel %vm1981, %v2051, %v1766
        %v2084 = vsel %vm1981, %v2052, %v1768
        %v2085 = vsel %vm1981, %v2053, %v1770
        %v2086 = vsel %vm1981, %v2054, %v1772
        %v2087 = vsel %vm1981, %v2055, %v1774
        %v2088 = vsel %vm1981, %v2056, %v1776
        %v2089 = vsel %vm1981, %v2057, %v1778
        %v2090 = vsel %vm1981, %v2058, %v1780
        %v2091 = vsel %vm1981, %v2059, %v1782
        %v2092 = vsel %vm1981, %v2060, %v1784
        %v2093 = vsel %vm1981, %v2061, %v1786
        %v2094 = vsel %vm1981, %v2062, %v1788
        %v2095 = vsel %vm1981, %v2063, %v1790
        %v2096 = vsel %vm1981, %v2064, %v1792
        %v2097 = vsel %vm1981, %v2065, %v1794
        %v2098 = vsel %vm1981, %v2066, %v1796
        %v2099 = vsel %vm1981, %v2067, %v1798
        %v2100 = vsel %vm1981, %v2068, %v1800
        %v2101 = vsel %vm1981, %v2069, %v1802
        %v2102 = vsel %vm1981, %v2070, %v1804
        %v2103 = vsel %vm1981, %v2071, %v1806
        %v2104 = vsel %vm1981, %v2072, %v1808
        %v2105 = vsel %vm1981, %v2073, %v1810
        %v2106 = vsel %vm1981, %v2074, %v1812
        %v2107 = vsel %vm1981, %v2075, %v1814
        %v2108 = vsel %vm1981, %v2076, %v1816
        %v2109 = vsel %vm1981, %v2077, %v1818
        %v2110 = vsel %vm1981, %v2078, %v1820
        %v2111 = vsel %vm2014, %v2079, %v1854
        %v2112 = vsel %vm2014, %v2080, %v1856
        %v2113 = vsel %vm2014, %v2081, %v1858
        %v2114 = vsel %vm2014, %v2082, %v1860
        %v2115 = vsel %vm2014, %v2083, %v1862
        %v2116 = vsel %vm2014, %v2084, %v1864
        %v2117 = vsel %vm2014, %v2085, %v1866
        %v2118 = vsel %vm2014, %v2086, %v1868
        %v2119 = vsel %vm2014, %v2087, %v1870
        %v2120 = vsel %vm2014, %v2088, %v1872
        %v2121 = vsel %vm2014, %v2089, %v1874
        %v2122 = vsel %vm2014, %v2090, %v1876
        %v2123 = vsel %vm2014, %v2091, %v1878
        %v2124 = vsel %vm2014, %v2092, %v1880
        %v2125 = vsel %vm2014, %v2093, %v1882
        %v2126 = vsel %vm2014, %v2094, %v1884
        %v2127 = vsel %vm2014, %v2095, %v1886
        %v2128 = vsel %vm2014, %v2096, %v1888
        %v2129 = vsel %vm2014, %v2097, %v1890
        %v2130 = vsel %vm2014, %v2098, %v1892
        %v2131 = vsel %vm2014, %v2099, %v1894
        %v2132 = vsel %vm2014, %v2100, %v1896
        %v2133 = vsel %vm2014, %v2101, %v1898
        %v2134 = vsel %vm2014, %v2102, %v1900
        %v2135 = vsel %vm2014, %v2103, %v1902
        %v2136 = vsel %vm2014, %v2104, %v1904
        %v2137 = vsel %vm2014, %v2105, %v1906
        %v2138 = vsel %vm2014, %v2106, %v1908
        %v2139 = vsel %vm2014, %v2107, %v1910
        %v2140 = vsel %vm2014, %v2108, %v1912
        %v2141 = vsel %vm2014, %v2109, %v1914
        %v2142 = vsel %vm2014, %v2110, %v1916
        %v2143 = vpack.c.bf16 %v2016, %v2015
        %v2144 = vpack.c.bf16 %v2112, %v2111
        %v2145 = vpack.c.bf16 %v1217, %v1215
        %v2146 = vpack.c.bf16 %v2018, %v2017
        %v2147 = vpack.c.bf16 %v2114, %v2113
        %v2148 = vpack.c.bf16 %v1222, %v1220
        %v2149 = vpack.c.bf16 %v2020, %v2019
        %v2150 = vpack.c.bf16 %v2116, %v2115
        %v2151 = vpack.c.bf16 %v1227, %v1225
        %v2152 = vpack.c.bf16 %v2022, %v2021
        %v2153 = vpack.c.bf16 %v2118, %v2117
        %v2154 = vpack.c.bf16 %v1232, %v1230
        %v2155 = vpack.c.bf16 %v2024, %v2023
        %v2156 = vpack.c.bf16 %v2120, %v2119
        %v2157 = vpack.c.bf16 %v1237, %v1235
        %v2158 = vpack.c.bf16 %v2026, %v2025
        %v2159 = vpack.c.bf16 %v2122, %v2121
        %v2160 = vpack.c.bf16 %v1242, %v1240
        %v2161 = vpack.c.bf16 %v2028, %v2027
        %v2162 = vpack.c.bf16 %v2124, %v2123
        %v2163 = vpack.c.bf16 %v1247, %v1245
        %v2164 = vpack.c.bf16 %v2030, %v2029
        %v2165 = vpack.c.bf16 %v2126, %v2125
        %v2166 = vpack.c.bf16 %v1252, %v1250
        %v2167 = vpack.c.bf16 %v2032, %v2031
        %v2168 = vpack.c.bf16 %v2128, %v2127
        %v2169 = vpack.c.bf16 %v1257, %v1255
        %v2170 = vpack.c.bf16 %v2034, %v2033
        %v2171 = vpack.c.bf16 %v2130, %v2129
        %v2172 = vpack.c.bf16 %v1262, %v1260
        %v2173 = vpack.c.bf16 %v2036, %v2035
        %v2174 = vpack.c.bf16 %v2132, %v2131
        %v2175 = vpack.c.bf16 %v1267, %v1265
        %v2176 = vpack.c.bf16 %v2038, %v2037
        %v2177 = vpack.c.bf16 %v2134, %v2133
        %v2178 = vpack.c.bf16 %v1272, %v1270
        %v2179 = vpack.c.bf16 %v2040, %v2039
        %v2180 = vpack.c.bf16 %v2136, %v2135
        %v2181 = vpack.c.bf16 %v1277, %v1275
        %v2182 = vpack.c.bf16 %v2042, %v2041
        %v2183 = vpack.c.bf16 %v2138, %v2137
        %v2184 = vpack.c.bf16 %v1282, %v1280
        %v2185 = vpack.c.bf16 %v2044, %v2043
        %v2186 = vpack.c.bf16 %v2140, %v2139
        %v2187 = vpack.c.bf16 %v1327, %v1325
        %v2188 = vpack.c.bf16 %v2046, %v2045
        %v2189 = vpack.c.bf16 %v2142, %v2141
        %v2190 = vpack.c.bf16 %v1340, %v1338
        %v2191 = vld [vmem:[%s4] sm:$0xf]
        %v2192 = vld [vmem:[%s4 + $0x4] sm:$0xf]
        %v2193 = vld [vmem:[%s4 + $0x8] sm:$0xf]
        %v2194 = vld [vmem:[%s4 + $0xc] sm:$0xf]
        %v2195 = vld [vmem:[%s4 + $0x10] sm:$0xf]
        %v2196 = vld [vmem:[%s4 + $0x14] sm:$0xf]
        %v2197 = vld [vmem:[%s4 + $0x18] sm:$0xf]
        %v2198 = vld [vmem:[%s4 + $0x1c] sm:$0xf]
        %v2199 = vld [vmem:[%s4 + $0x20] sm:$0xf]
        %v2200 = vld [vmem:[%s4 + $0x24] sm:$0xf]
        %v2201 = vld [vmem:[%s4 + $0x28] sm:$0xf]
        %v2202 = vld [vmem:[%s4 + $0x2c] sm:$0xf]
        %v2203 = vld [vmem:[%s4 + $0x30] sm:$0xf]
        %v2204 = vld [vmem:[%s4 + $0x34] sm:$0xf]
        %v2205 = vld [vmem:[%s4 + $0x38] sm:$0xf]
        %v2206 = vld [vmem:[%s4 + $0x3c] sm:$0xf]
        %v2207 = vld [vmem:[%s4 + $0x40] sm:$0xf]
        %v2208 = vld [vmem:[%s4 + $0x44] sm:$0xf]
        %v2209 = vld [vmem:[%s4 + $0x48] sm:$0xf]
        %v2210 = vld [vmem:[%s4 + $0x4c] sm:$0xf]
        %v2211 = vld [vmem:[%s4 + $0x50] sm:$0xf]
        %v2212 = vld [vmem:[%s4 + $0x54] sm:$0xf]
        %v2213 = vld [vmem:[%s4 + $0x58] sm:$0xf]
        %v2214 = vld [vmem:[%s4 + $0x5c] sm:$0xf]
        %v2215 = vld [vmem:[%s4 + $0x60] sm:$0xf]
        %v2216 = vld [vmem:[%s4 + $0x64] sm:$0xf]
        %v2217 = vld [vmem:[%s4 + $0x68] sm:$0xf]
        %v2218 = vld [vmem:[%s4 + $0x6c] sm:$0xf]
        %v2219 = vld [vmem:[%s4 + $0x70] sm:$0xf]
        %v2220 = vld [vmem:[%s4 + $0x74] sm:$0xf]
        %v2221 = vld [vmem:[%s4 + $0x78] sm:$0xf]
        %v2222 = vld [vmem:[%s4 + $0x7c] sm:$0xf]
        %v2223 = vld [vmem:[%s4 + $0x80] sm:$0xf]
        %v2224 = vld [vmem:[%s4 + $0x84] sm:$0xf]
        %v2225 = vld [vmem:[%s4 + $0x88] sm:$0xf]
        %v2226 = vld [vmem:[%s4 + $0x8c] sm:$0xf]
        %v2227 = vld [vmem:[%s5] sm:$0x1]
        %v2229 = vlaneseq
        %v2230 = vshrl.u32 %v2229, 7
        %v2231 = vsub.s32 0, %v2230
        %v2232 = vrot.slane %v2227, %v2231
        %v2270 = vunpack.c.l.b16 %v2191
        %v2271 = vunpack.c.l.b16 %v2192
        %v2272 = vunpack.c.l.b16 %v2193
        %v2273 = vunpack.c.l.b16 %v2194
        %v2274 = vunpack.c.l.b16 %v2195
        %v2275 = vunpack.c.l.b16 %v2196
        %v2276 = vunpack.c.l.b16 %v2197
        %v2277 = vunpack.c.l.b16 %v2198
        %v2278 = vunpack.c.l.b16 %v2199
        %v2279 = vunpack.c.l.b16 %v2200
        %v2280 = vunpack.c.l.b16 %v2201
        %v2281 = vunpack.c.l.b16 %v2202
        %v2282 = vunpack.c.l.b16 %v2203
        %v2283 = vunpack.c.l.b16 %v2204
        %v2284 = vunpack.c.l.b16 %v2205
        %v2285 = vunpack.c.l.b16 %v2206
        %v2286 = vunpack.c.l.b16 %v2207
        %v2287 = vunpack.c.l.b16 %v2208
        %v2288 = vunpack.c.l.b16 %v2209
        %v2289 = vunpack.c.l.b16 %v2210
        %v2290 = vunpack.c.l.b16 %v2211
        %v2291 = vunpack.c.l.b16 %v2212
        %v2292 = vunpack.c.l.b16 %v2213
        %v2293 = vunpack.c.l.b16 %v2214
        %v2294 = vunpack.c.l.b16 %v2215
        %v2295 = vunpack.c.l.b16 %v2216
        %v2296 = vunpack.c.l.b16 %v2217
        %v2297 = vunpack.c.l.b16 %v2218
        %v2298 = vunpack.c.l.b16 %v2219
        %v2299 = vunpack.c.l.b16 %v2220
        %v2300 = vunpack.c.l.b16 %v2221
        %v2301 = vunpack.c.l.b16 %v2222
        %v2302 = vunpack.c.l.b16 %v2223
        %v2303 = vunpack.c.l.b16 %v2224
        %v2304 = vunpack.c.l.b16 %v2225
        %v2305 = vunpack.c.l.b16 %v2226
        %v2306 = vpack.c.b16 %v2271, %v2270
        %v2307 = vpack.c.b16 %v2273, %v2272
        %v2308 = vpack.c.b16 %v2275, %v2274
        %v2309 = vpack.c.b16 %v2277, %v2276
        %v2310 = vpack.c.b16 %v2279, %v2278
        %v2311 = vpack.c.b16 %v2281, %v2280
        %v2312 = vpack.c.b16 %v2283, %v2282
        %v2313 = vpack.c.b16 %v2285, %v2284
        %v2314 = vpack.c.b16 %v2287, %v2286
        %v2315 = vpack.c.b16 %v2289, %v2288
        %v2316 = vpack.c.b16 %v2291, %v2290
        %v2317 = vpack.c.b16 %v2293, %v2292
        %v2318 = vpack.c.b16 %v2295, %v2294
        %v2319 = vpack.c.b16 %v2297, %v2296
        %v2320 = vpack.c.b16 %v2299, %v2298
        %v2321 = vpack.c.b16 %v2301, %v2300
        %v2322 = vpack.c.b16 %v2303, %v2302
        %v2323 = vpack.c.b16 %v2305, %v2304
        %v2343 = vsel %vm309, %v2145, 0
        %v2346 = vsel %vm309, %v2148, 0
        %v2349 = vsel %vm309, %v2151, 0
        %v2352 = vsel %vm309, %v2154, 0
        %v2355 = vsel %vm309, %v2157, 0
        %v2358 = vsel %vm309, %v2160, 0
        %v2361 = vsel %vm309, %v2163, 0
        %v2364 = vsel %vm309, %v2166, 0
        %v2367 = vsel %vm309, %v2169, 0
        %v2370 = vsel %vm309, %v2172, 0
        %v2373 = vsel %vm309, %v2175, 0
        %v2376 = vsel %vm309, %v2178, 0
        %v2379 = vsel %vm309, %v2181, 0
        %v2382 = vsel %vm309, %v2184, 0
        %v2385 = vsel %vm309, %v2187, 0
        %v2388 = vsel %vm309, %v2190, 0
        %2390 = vmatprep.subr.bf16.mxu0 0
        %2391 = vmatpush1.bf16.msra.mxu0 %v2306
        %2392 = vmatprep.subr.bf16.mxu0 0
        %2393 = vmatpush1.bf16.msra.mxu0 %v2307
        %2394 = vmatprep.subr.bf16.mxu0 0
        %2395 = vmatpush1.bf16.msra.mxu0 %v2308
        %2396 = vmatprep.subr.bf16.mxu0 0
        %2397 = vmatpush1.bf16.msra.mxu0 %v2309
        %2398 = vmatprep.subr.bf16.mxu0 0
        %2399 = vmatpush1.bf16.msra.mxu0 %v2310
        %2400 = vmatprep.subr.bf16.mxu0 0
        %2401 = vmatpush1.bf16.msra.mxu0 %v2311
        %2402 = vmatprep.subr.bf16.mxu0 0
        %2403 = vmatpush1.bf16.msra.mxu0 %v2312
        %2404 = vmatprep.subr.bf16.mxu0 0
        %2405 = vmatpush1.bf16.msra.mxu0 %v2313
        %2406 = vmatprep.subr.bf16.mxu0 0
        %2407 = vmatpush1.bf16.msra.mxu0 %v2314
        %2408 = vmatprep.subr.bf16.mxu0 0
        %2409 = vmatpush1.bf16.msra.mxu0 %v2315
        %2410 = vmatprep.subr.bf16.mxu0 0
        %2411 = vmatpush1.bf16.msra.mxu0 %v2316
        %2412 = vmatprep.subr.bf16.mxu0 0
        %2413 = vmatpush1.bf16.msra.mxu0 %v2317
        %2414 = vmatprep.subr.bf16.mxu0 0
        %2415 = vmatpush1.bf16.msra.mxu0 %v2318
        %2416 = vmatprep.subr.bf16.mxu0 0
        %2417 = vmatpush1.bf16.msra.mxu0 %v2319
        %2418 = vmatprep.subr.bf16.mxu0 0
        %2419 = vmatpush1.bf16.msra.mxu0 %v2320
        %2420 = vmatprep.subr.bf16.mxu0 0
        %2421 = vmatpush1.bf16.msra.mxu0 %v2321
        %2422 = vmatprep.mubr.bf16.mxu0 %v2144
        %2423 = vmatmul.mubr.bf16.gmra.mrb[0].mxu0 %v2143
        %v2424 = vpop.f32.mrb[0].mxu0
        %v2425 = vadd.f32 %v2232, %v2424
        %v2426 = vpop.f32.mrb[0].mxu0
        %v2427 = vpop.f32.mrb[0].mxu0
        %v2428 = vadd.f32 %v2232, %v2427
        %v2429 = vpop.f32.mrb[0].mxu0
        %2430 = vmatprep.mubr.bf16.mxu0 %v2147
        %2431 = vmatmul.mubr.bf16.gmra.mrb[0].mxu0 %v2146
        %v2432 = vpop.f32.mrb[0].mxu0
        %v2433 = vadd.f32 %v2232, %v2432
        %v2434 = vpop.f32.mrb[0].mxu0
        %v2435 = vpop.f32.mrb[0].mxu0
        %v2436 = vadd.f32 %v2232, %v2435
        %v2437 = vpop.f32.mrb[0].mxu0
        %2438 = vmatprep.mubr.bf16.mxu0 %v2150
        %2439 = vmatmul.mubr.bf16.gmra.mrb[0].mxu0 %v2149
        %v2440 = vpop.f32.mrb[0].mxu0
        %v2441 = vadd.f32 %v2232, %v2440
        %v2442 = vpop.f32.mrb[0].mxu0
        %v2443 = vpop.f32.mrb[0].mxu0
        %v2444 = vadd.f32 %v2232, %v2443
        %v2445 = vpop.f32.mrb[0].mxu0
        %2446 = vmatprep.mubr.bf16.mxu0 %v2153
        %2447 = vmatmul.mubr.bf16.gmra.mrb[0].mxu0 %v2152
        %v2448 = vpop.f32.mrb[0].mxu0
        %v2449 = vadd.f32 %v2232, %v2448
        %v2450 = vpop.f32.mrb[0].mxu0
        %v2451 = vpop.f32.mrb[0].mxu0
        %v2452 = vadd.f32 %v2232, %v2451
        %v2453 = vpop.f32.mrb[0].mxu0
        %2454 = vmatprep.mubr.bf16.mxu0 %v2156
        %2455 = vmatmul.mubr.bf16.gmra.mrb[0].mxu0 %v2155
        %v2456 = vpop.f32.mrb[0].mxu0
        %v2457 = vadd.f32 %v2232, %v2456
        %v2458 = vpop.f32.mrb[0].mxu0
        %v2459 = vpop.f32.mrb[0].mxu0
        %v2460 = vadd.f32 %v2232, %v2459
        %v2461 = vpop.f32.mrb[0].mxu0
        %2462 = vmatprep.mubr.bf16.mxu0 %v2159
        %2463 = vmatmul.mubr.bf16.gmra.mrb[0].mxu0 %v2158
        %v2464 = vpop.f32.mrb[0].mxu0
        %v2465 = vadd.f32 %v2232, %v2464
        %v2466 = vpop.f32.mrb[0].mxu0
        %v2467 = vpop.f32.mrb[0].mxu0
        %v2468 = vadd.f32 %v2232, %v2467
        %v2469 = vpop.f32.mrb[0].mxu0
        %2470 = vmatprep.mubr.bf16.mxu0 %v2162
        %2471 = vmatmul.mubr.bf16.gmra.mrb[0].mxu0 %v2161
        %v2472 = vpop.f32.mrb[0].mxu0
        %v2473 = vadd.f32 %v2232, %v2472
        %v2474 = vpop.f32.mrb[0].mxu0
        %v2475 = vpop.f32.mrb[0].mxu0
        %v2476 = vadd.f32 %v2232, %v2475
        %v2477 = vpop.f32.mrb[0].mxu0
        %2478 = vmatprep.mubr.bf16.mxu0 %v2165
        %2479 = vmatmul.mubr.bf16.gmra.mrb[0].mxu0 %v2164
        %v2480 = vpop.f32.mrb[0].mxu0
        %v2481 = vadd.f32 %v2232, %v2480
        %v2482 = vpop.f32.mrb[0].mxu0
        %v2483 = vpop.f32.mrb[0].mxu0
        %v2484 = vadd.f32 %v2232, %v2483
        %v2485 = vpop.f32.mrb[0].mxu0
        %2486 = vmatprep.mubr.bf16.mxu0 %v2168
        %2487 = vmatmul.mubr.bf16.gmra.mrb[0].mxu0 %v2167
        %v2488 = vpop.f32.mrb[0].mxu0
        %v2489 = vadd.f32 %v2232, %v2488
        %v2490 = vpop.f32.mrb[0].mxu0
        %v2491 = vpop.f32.mrb[0].mxu0
        %v2492 = vadd.f32 %v2232, %v2491
        %v2493 = vpop.f32.mrb[0].mxu0
        %2494 = vmatprep.mubr.bf16.mxu0 %v2171
        %2495 = vmatmul.mubr.bf16.gmra.mrb[0].mxu0 %v2170
        %v2496 = vpop.f32.mrb[0].mxu0
        %v2497 = vadd.f32 %v2232, %v2496
        %v2498 = vpop.f32.mrb[0].mxu0
        %v2499 = vpop.f32.mrb[0].mxu0
        %v2500 = vadd.f32 %v2232, %v2499
        %v2501 = vpop.f32.mrb[0].mxu0
        %2502 = vmatprep.mubr.bf16.mxu0 %v2174
        %2503 = vmatmul.mubr.bf16.gmra.mrb[0].mxu0 %v2173
        %v2504 = vpop.f32.mrb[0].mxu0
        %v2505 = vadd.f32 %v2232, %v2504
        %v2506 = vpop.f32.mrb[0].mxu0
        %v2507 = vpop.f32.mrb[0].mxu0
        %v2508 = vadd.f32 %v2232, %v2507
        %v2509 = vpop.f32.mrb[0].mxu0
        %2510 = vmatprep.mubr.bf16.mxu0 %v2177
        %2511 = vmatmul.mubr.bf16.gmra.mrb[0].mxu0 %v2176
        %v2512 = vpop.f32.mrb[0].mxu0
        %v2513 = vadd.f32 %v2232, %v2512
        %v2514 = vpop.f32.mrb[0].mxu0
        %v2515 = vpop.f32.mrb[0].mxu0
        %v2516 = vadd.f32 %v2232, %v2515
        %v2517 = vpop.f32.mrb[0].mxu0
        %2518 = vmatprep.mubr.bf16.mxu0 %v2180
        %2519 = vmatmul.mubr.bf16.gmra.mrb[0].mxu0 %v2179
        %v2520 = vpop.f32.mrb[0].mxu0
        %v2521 = vadd.f32 %v2232, %v2520
        %v2522 = vpop.f32.mrb[0].mxu0
        %v2523 = vpop.f32.mrb[0].mxu0
        %v2524 = vadd.f32 %v2232, %v2523
        %v2525 = vpop.f32.mrb[0].mxu0
        %2526 = vmatprep.mubr.bf16.mxu0 %v2183
        %2527 = vmatmul.mubr.bf16.gmra.mrb[0].mxu0 %v2182
        %v2528 = vpop.f32.mrb[0].mxu0
        %v2529 = vadd.f32 %v2232, %v2528
        %v2530 = vpop.f32.mrb[0].mxu0
        %v2531 = vpop.f32.mrb[0].mxu0
        %v2532 = vadd.f32 %v2232, %v2531
        %v2533 = vpop.f32.mrb[0].mxu0
        %2534 = vmatprep.mubr.bf16.mxu0 %v2186
        %2535 = vmatmul.mubr.bf16.gmra.mrb[0].mxu0 %v2185
        %v2536 = vpop.f32.mrb[0].mxu0
        %v2537 = vadd.f32 %v2232, %v2536
        %v2538 = vpop.f32.mrb[0].mxu0
        %v2539 = vpop.f32.mrb[0].mxu0
        %v2540 = vadd.f32 %v2232, %v2539
        %v2541 = vpop.f32.mrb[0].mxu0
        %2542 = vmatprep.mubr.bf16.mxu0 %v2189
        %2543 = vmatmul.mubr.bf16.gmra.mrb[0].mxu0 %v2188
        %v2544 = vpop.f32.mrb[0].mxu0
        %v2545 = vadd.f32 %v2232, %v2544
        %v2546 = vpop.f32.mrb[0].mxu0
        %v2547 = vpop.f32.mrb[0].mxu0
        %v2548 = vadd.f32 %v2232, %v2547
        %v2549 = vpop.f32.mrb[0].mxu0
        %2550 = vdwg.mxu0
        %2551 = vmatprep.subr.bf16.mxu0 0
        %2552 = vmatpush1.bf16.msra.mxu0 %v2322
        %2553 = vmatprep.subr.bf16.mxu0 0
        %2554 = vmatpush1.bf16.msra.mxu0 %v2323
        %2555 = vmatprep.subr.bf16.mxu0 0
        %2556 = vmatpush1.bf16.msra.mxu0 0
        %2557 = vmatprep.subr.bf16.mxu0 0
        %2558 = vmatpush1.bf16.msra.mxu0 0
        %2559 = vmatprep.subr.bf16.mxu0 0
        %2560 = vmatpush1.bf16.msra.mxu0 0
        %2561 = vmatprep.subr.bf16.mxu0 0
        %2562 = vmatpush1.bf16.msra.mxu0 0
        %2563 = vmatprep.subr.bf16.mxu0 0
        %2564 = vmatpush1.bf16.msra.mxu0 0
        %2565 = vmatprep.subr.bf16.mxu0 0
        %2566 = vmatpush1.bf16.msra.mxu0 0
        %2567 = vmatprep.subr.bf16.mxu0 0
        %2568 = vmatpush1.bf16.msra.mxu0 0
        %2569 = vmatprep.subr.bf16.mxu0 0
        %2570 = vmatpush1.bf16.msra.mxu0 0
        %2571 = vmatprep.subr.bf16.mxu0 0
        %2572 = vmatpush1.bf16.msra.mxu0 0
        %2573 = vmatprep.subr.bf16.mxu0 0
        %2574 = vmatpush1.bf16.msra.mxu0 0
        %2575 = vmatprep.subr.bf16.mxu0 0
        %2576 = vmatpush1.bf16.msra.mxu0 0
        %2577 = vmatprep.subr.bf16.mxu0 0
        %2578 = vmatpush1.bf16.msra.mxu0 0
        %2579 = vmatprep.subr.bf16.mxu0 0
        %2580 = vmatpush1.bf16.msra.mxu0 0
        %2581 = vmatprep.subr.bf16.mxu0 0
        %2582 = vmatpush1.bf16.msra.mxu0 0
        %2583 = vmatprep.mubr.bf16.mxu0 0
        %2584 = vmatmul.mubr.bf16.gmra.mrb[0].mxu0 %v2343
        %v2585 = vpop.f32.mrb[0].mxu0
        %v2586 = vadd.f32 %v2425, %v2585
        %v2587 = vpop.f32.mrb[0].mxu0
        %v2588 = vpop.f32.mrb[0].mxu0
        %v2589 = vadd.f32 %v2428, %v2588
        %v2590 = vpop.f32.mrb[0].mxu0
        %2591 = vmatprep.mubr.bf16.mxu0 0
        %2592 = vmatmul.mubr.bf16.gmra.mrb[0].mxu0 %v2346
        %v2593 = vpop.f32.mrb[0].mxu0
        %v2594 = vadd.f32 %v2433, %v2593
        %v2595 = vpop.f32.mrb[0].mxu0
        %v2596 = vpop.f32.mrb[0].mxu0
        %v2597 = vadd.f32 %v2436, %v2596
        %v2598 = vpop.f32.mrb[0].mxu0
        %2599 = vmatprep.mubr.bf16.mxu0 0
        %2600 = vmatmul.mubr.bf16.gmra.mrb[0].mxu0 %v2349
        %v2601 = vpop.f32.mrb[0].mxu0
        %v2602 = vadd.f32 %v2441, %v2601
        %v2603 = vpop.f32.mrb[0].mxu0
        %v2604 = vpop.f32.mrb[0].mxu0
        %v2605 = vadd.f32 %v2444, %v2604
        %v2606 = vpop.f32.mrb[0].mxu0
        %2607 = vmatprep.mubr.bf16.mxu0 0
        %2608 = vmatmul.mubr.bf16.gmra.mrb[0].mxu0 %v2352
        %v2609 = vpop.f32.mrb[0].mxu0
        %v2610 = vadd.f32 %v2449, %v2609
        %v2611 = vpop.f32.mrb[0].mxu0
        %v2612 = vpop.f32.mrb[0].mxu0
        %v2613 = vadd.f32 %v2452, %v2612
        %v2614 = vpop.f32.mrb[0].mxu0
        %2615 = vmatprep.mubr.bf16.mxu0 0
        %2616 = vmatmul.mubr.bf16.gmra.mrb[0].mxu0 %v2355
        %v2617 = vpop.f32.mrb[0].mxu0
        %v2618 = vadd.f32 %v2457, %v2617
        %v2619 = vpop.f32.mrb[0].mxu0
        %v2620 = vpop.f32.mrb[0].mxu0
        %v2621 = vadd.f32 %v2460, %v2620
        %v2622 = vpop.f32.mrb[0].mxu0
        %2623 = vmatprep.mubr.bf16.mxu0 0
        %2624 = vmatmul.mubr.bf16.gmra.mrb[0].mxu0 %v2358
        %v2625 = vpop.f32.mrb[0].mxu0
        %v2626 = vadd.f32 %v2465, %v2625
        %v2627 = vpop.f32.mrb[0].mxu0
        %v2628 = vpop.f32.mrb[0].mxu0
        %v2629 = vadd.f32 %v2468, %v2628
        %v2630 = vpop.f32.mrb[0].mxu0
        %2631 = vmatprep.mubr.bf16.mxu0 0
        %2632 = vmatmul.mubr.bf16.gmra.mrb[0].mxu0 %v2361
        %v2633 = vpop.f32.mrb[0].mxu0
        %v2634 = vadd.f32 %v2473, %v2633
        %v2635 = vpop.f32.mrb[0].mxu0
        %v2636 = vpop.f32.mrb[0].mxu0
        %v2637 = vadd.f32 %v2476, %v2636
        %v2638 = vpop.f32.mrb[0].mxu0
        %2639 = vmatprep.mubr.bf16.mxu0 0
        %2640 = vmatmul.mubr.bf16.gmra.mrb[0].mxu0 %v2364
        %v2641 = vpop.f32.mrb[0].mxu0
        %v2642 = vadd.f32 %v2481, %v2641
        %v2643 = vpop.f32.mrb[0].mxu0
        %v2644 = vpop.f32.mrb[0].mxu0
        %v2645 = vadd.f32 %v2484, %v2644
        %v2646 = vpop.f32.mrb[0].mxu0
        %2647 = vmatprep.mubr.bf16.mxu0 0
        %2648 = vmatmul.mubr.bf16.gmra.mrb[0].mxu0 %v2367
        %v2649 = vpop.f32.mrb[0].mxu0
        %v2650 = vadd.f32 %v2489, %v2649
        %v2651 = vpop.f32.mrb[0].mxu0
        %v2652 = vpop.f32.mrb[0].mxu0
        %v2653 = vadd.f32 %v2492, %v2652
        %v2654 = vpop.f32.mrb[0].mxu0
        %2655 = vmatprep.mubr.bf16.mxu0 0
        %2656 = vmatmul.mubr.bf16.gmra.mrb[0].mxu0 %v2370
        %v2657 = vpop.f32.mrb[0].mxu0
        %v2658 = vadd.f32 %v2497, %v2657
        %v2659 = vpop.f32.mrb[0].mxu0
        %v2660 = vpop.f32.mrb[0].mxu0
        %v2661 = vadd.f32 %v2500, %v2660
        %v2662 = vpop.f32.mrb[0].mxu0
        %2663 = vmatprep.mubr.bf16.mxu0 0
        %2664 = vmatmul.mubr.bf16.gmra.mrb[0].mxu0 %v2373
        %v2665 = vpop.f32.mrb[0].mxu0
        %v2666 = vadd.f32 %v2505, %v2665
        %v2667 = vpop.f32.mrb[0].mxu0
        %v2668 = vpop.f32.mrb[0].mxu0
        %v2669 = vadd.f32 %v2508, %v2668
        %v2670 = vpop.f32.mrb[0].mxu0
        %2671 = vmatprep.mubr.bf16.mxu0 0
        %2672 = vmatmul.mubr.bf16.gmra.mrb[0].mxu0 %v2376
        %v2673 = vpop.f32.mrb[0].mxu0
        %v2674 = vadd.f32 %v2513, %v2673
        %v2675 = vpop.f32.mrb[0].mxu0
        %v2676 = vpop.f32.mrb[0].mxu0
        %v2677 = vadd.f32 %v2516, %v2676
        %v2678 = vpop.f32.mrb[0].mxu0
        %2679 = vmatprep.mubr.bf16.mxu0 0
        %2680 = vmatmul.mubr.bf16.gmra.mrb[0].mxu0 %v2379
        %v2681 = vpop.f32.mrb[0].mxu0
        %v2682 = vadd.f32 %v2521, %v2681
        %v2683 = vpop.f32.mrb[0].mxu0
        %v2684 = vpop.f32.mrb[0].mxu0
        %v2685 = vadd.f32 %v2524, %v2684
        %v2686 = vpop.f32.mrb[0].mxu0
        %2687 = vmatprep.mubr.bf16.mxu0 0
        %2688 = vmatmul.mubr.bf16.gmra.mrb[0].mxu0 %v2382
        %v2689 = vpop.f32.mrb[0].mxu0
        %v2690 = vadd.f32 %v2529, %v2689
        %v2691 = vpop.f32.mrb[0].mxu0
        %v2692 = vpop.f32.mrb[0].mxu0
        %v2693 = vadd.f32 %v2532, %v2692
        %v2694 = vpop.f32.mrb[0].mxu0
        %2695 = vmatprep.mubr.bf16.mxu0 0
        %2696 = vmatmul.mubr.bf16.gmra.mrb[0].mxu0 %v2385
        %v2697 = vpop.f32.mrb[0].mxu0
        %v2698 = vadd.f32 %v2537, %v2697
        %v2699 = vpop.f32.mrb[0].mxu0
        %v2700 = vpop.f32.mrb[0].mxu0
        %v2701 = vadd.f32 %v2540, %v2700
        %v2702 = vpop.f32.mrb[0].mxu0
        %2703 = vmatprep.mubr.bf16.mxu0 0
        %2704 = vmatmul.mubr.bf16.gmra.mrb[0].mxu0 %v2388
        %v2705 = vpop.f32.mrb[0].mxu0
        %v2706 = vadd.f32 %v2545, %v2705
        %v2707 = vpop.f32.mrb[0].mxu0
        %v2708 = vpop.f32.mrb[0].mxu0
        %v2709 = vadd.f32 %v2548, %v2708
        %v2710 = vpop.f32.mrb[0].mxu0
        %2711 = vdwg.mxu0
        %2712 = vst.msk [vmem:[%s269] sm:$0xff] %vm1981, %v2586
        %2713 = vst.msk [vmem:[%s269 + $0x8] sm:$0xff] %vm1981, %v2589
        %2714 = vst.msk [vmem:[%s269 + $0x10] sm:$0xff] %vm1981, %v2594
        %2715 = vst.msk [vmem:[%s269 + $0x18] sm:$0xff] %vm1981, %v2597
        %2716 = vst.msk [vmem:[%s269 + $0x20] sm:$0xff] %vm1981, %v2602
        %2717 = vst.msk [vmem:[%s269 + $0x28] sm:$0xff] %vm1981, %v2605
        %2718 = vst.msk [vmem:[%s269 + $0x30] sm:$0xff] %vm1981, %v2610
        %2719 = vst.msk [vmem:[%s269 + $0x38] sm:$0xff] %vm1981, %v2613
        %2720 = vst.msk [vmem:[%s269 + $0x40] sm:$0xff] %vm1981, %v2618
        %2721 = vst.msk [vmem:[%s269 + $0x48] sm:$0xff] %vm1981, %v2621
        %2722 = vst.msk [vmem:[%s269 + $0x50] sm:$0xff] %vm1981, %v2626
        %2723 = vst.msk [vmem:[%s269 + $0x58] sm:$0xff] %vm1981, %v2629
        %2724 = vst.msk [vmem:[%s269 + $0x60] sm:$0xff] %vm1981, %v2634
        %2725 = vst.msk [vmem:[%s269 + $0x68] sm:$0xff] %vm1981, %v2637
        %2726 = vst.msk [vmem:[%s269 + $0x70] sm:$0xff] %vm1981, %v2642
        %2727 = vst.msk [vmem:[%s269 + $0x78] sm:$0xff] %vm1981, %v2645
        %2728 = vst.msk [vmem:[%s269 + $0x80] sm:$0xff] %vm1981, %v2650
        %2729 = vst.msk [vmem:[%s269 + $0x88] sm:$0xff] %vm1981, %v2653
        %2730 = vst.msk [vmem:[%s269 + $0x90] sm:$0xff] %vm1981, %v2658
        %2731 = vst.msk [vmem:[%s269 + $0x98] sm:$0xff] %vm1981, %v2661
        %2732 = vst.msk [vmem:[%s269 + $0xa0] sm:$0xff] %vm1981, %v2666
        %2733 = vst.msk [vmem:[%s269 + $0xa8] sm:$0xff] %vm1981, %v2669
        %2734 = vst.msk [vmem:[%s269 + $0xb0] sm:$0xff] %vm1981, %v2674
        %2735 = vst.msk [vmem:[%s269 + $0xb8] sm:$0xff] %vm1981, %v2677
        %2736 = vst.msk [vmem:[%s269 + $0xc0] sm:$0xff] %vm1981, %v2682
        %2737 = vst.msk [vmem:[%s269 + $0xc8] sm:$0xff] %vm1981, %v2685
        %2738 = vst.msk [vmem:[%s269 + $0xd0] sm:$0xff] %vm1981, %v2690
        %2739 = vst.msk [vmem:[%s269 + $0xd8] sm:$0xff] %vm1981, %v2693
        %2740 = vst.msk [vmem:[%s269 + $0xe0] sm:$0xff] %vm1981, %v2698
        %2741 = vst.msk [vmem:[%s269 + $0xe8] sm:$0xff] %vm1981, %v2701
        %2742 = vst.msk [vmem:[%s269 + $0xf0] sm:$0xff] %vm1981, %v2706
        %2743 = vst.msk [vmem:[%s269 + $0xf8] sm:$0xff] %vm1981, %v2709
        %s2744 = sand.u32 %s162, 1
        %s2745 = scalar_lea.sflag [#allocation5], %s2744
        %s2746 = sand.u32 %s162, 1
        %s2747 = smul.addr %s2746, 256
        %s2748 = scalar_lea.vmem [#allocation6], %s2747
        // Predicated region
        $region49: #{tpu_custom_call.1} parent=43 // pred_check
          %p2749 = pneg %p172
        $region50: #{tpu_custom_call.1} parent=43 // pred_check_branch
          %2751 = sbr.rel (%p2749) target = $region52
        $region51: #{tpu_custom_call.1} parent=43 // pred_region
          %s2753 = ssub.s32 4096, 4096
          %2754 = vsyncadd %s2745, %s2753
          %s2755 = smul.addr %s23, 32
          %s2756 = smul.addr %s2755, 128
          %s2757 = scalar_lea.hbm %s6, %s2756
          %s2758 = sshll.u32 %s2748, 4
          %s2759 = int_to_ptr.vmem [resolvable:$true] %s2758
          %2764 = dma.vmem_to_hbm [thread:$0]  %s2759, 4096, %s2757, %s2745, 128, 128, 8
        $region52: #{tpu_custom_call.1} parent=43 // pred_fallthru
          _
      $region44: #{tpu_custom_call.1} parent=5 // pred_fallthru
        _
      %p2765 = scmp.le.s32.totalorder 2, %s18
      // Predicated region
      $region53: #{tpu_custom_call.1} parent=5 // pred_check
        %p2766 = pneg %p2765
      $region54: #{tpu_custom_call.1} parent=5 // pred_check_branch
        %2768 = sbr.rel (%p2766) target = $region56
      $region55: #{tpu_custom_call.1} parent=5 // pred_region
        %s2769 = ssub.s32 %s18, 2
        // Predicated region
        $region57: #{tpu_custom_call.1} parent=55 // pred_check
          %p2770 = pneg %p178
        $region58: #{tpu_custom_call.1} parent=55 // pred_check_branch
          %2772 = sbr.rel (%p2770) target = $region60
        $region59: #{tpu_custom_call.1} parent=55 // pred_region
          %s2773 = sand.u32 %s163, 1
          %s2774 = scalar_lea.sflag [#allocation5], %s2773
          %s2775 = sand.u32 %s163, 1
          %s2776 = smul.addr %s2775, 256
          %s2777 = scalar_lea.vmem [#allocation6], %s2776
          %2778 = dma.done %s2774, 4096
        $region60: #{tpu_custom_call.1} parent=55 // pred_fallthru
          _
      $region56: #{tpu_custom_call.1} parent=5 // pred_fallthru
        _
    $region6: #{tpu_custom_call.1} parent=1 // loop_footer
      %s22 = sadd.s32 1, %s18
    $region7: #{tpu_custom_call.1} parent=1 // loop_footer_branch
      %17 = sbr.rel target = $region3
    $region8: #{tpu_custom_call.1} parent=1 // loop_exit
      _
    %2779 = vsyncpa [#allocation4], 1
    %s2780 = scalar_lea.sflag [#allocation4], 1
    %2781 = vsyncpa %s2780, 1
    %2782 = vsyncpa [#allocation5], 1
    %s2783 = scalar_lea.sflag [#allocation5], 1
    %2784 = vsyncpa %s2783, 1

</llo_original>
